<compile_context>
chip_gen: v5e
topology: v5e:2x2
jax: 0.10.0
libtpu: 0.0.40
codegen_flags: <defaults>
</compile_context>

<pallas_src>
import jax
import jax.numpy as jnp
from jax import lax
from jax.experimental import pallas as pl
from jax.experimental.pallas import tpu as pltpu

# -------------------------- model configuration ---------------------------
IMAGE_EMBEDDING = 64     # model_config['image_model']['image_embedding']
TEXT_EMBEDDING = 32      # model_config['text_model']['text_embedding']
PROJECTION_DIM = 128     # ProjectionHead projection_dim
TEMPERATURE = 1.0        # model_config['temperature']  (logits * exp(T), per the spec)

PATCH = 8                # ImageTower patch size (synthetic stand-in tower)
PATCH_DIM = 3 * PATCH * PATCH      # 192
TOKEN_DIM = 48           # TextTower token-embedding dim (synthetic stand-in)
VOCAB = 128
LN_EPS = 1e-5


# ------------------------------ helpers -----------------------------------
def _full_vmem_spec(a):
    n = a.ndim
    return pl.BlockSpec(a.shape, lambda *_, n=n: (0,) * n)


def _projection_head(x, head_ref, emb_dim):
    """ProjectionHead on packed params: Linear -> GELU -> Linear -> residual -> LayerNorm.

    head_ref rows: [0:emb_dim]=w1, [emb_dim:emb_dim+128]=w2, then b1, b2, gamma, beta.
    Static ref slices are zero-cost views.
    """
    base = emb_dim + PROJECTION_DIM
    w1 = head_ref[0:emb_dim, :]
    w2 = head_ref[emb_dim:base, :]
    b1 = head_ref[base:base + 1, :]
    b2 = head_ref[base + 1:base + 2, :]
    gamma = head_ref[base + 2:base + 3, :]
    beta = head_ref[base + 3:base + 4, :]

    projected = jnp.dot(x, w1, preferred_element_type=jnp.float32) + b1
    # TODO(synk): PyTorch nn.GELU() defaults to exact erf; tanh approximation used here.
    h = jax.nn.gelu(projected, approximate=True)
    h = jnp.dot(h, w2, preferred_element_type=jnp.float32) + b2
    h = h + projected                      # residual (dropout == identity at inference)
    mu = jnp.mean(h, axis=-1, keepdims=True)
    var = jnp.mean((h - mu) ** 2, axis=-1, keepdims=True)
    h = (h - mu) * lax.rsqrt(var + LN_EPS)
    return h * gamma + beta


# --------------------------- fused forward kernel --------------------------
def _lit_fused_kernel(
    temp_ref,          # SMEM (1, 1)       temperature coefficient
    cap_ref,           # SMEM (B, S)       caption token ids (int32)
    pooled_img_ref,    # VMEM (B, 192)     pre-pooled image patches
    tok_emb_ref,       # VMEM (VOCAB, 48)  token-embedding table (fully VMEM-resident)
    img_tower_ref,     # VMEM (193, 64)    rows [0:192]=W, [192]=b
    txt_tower_ref,     # VMEM (49, 32)     rows [0:48]=W, [48]=b
    img_head_ref,      # VMEM (196, 128)   packed image projection head
    txt_head_ref,      # VMEM (164, 128)   packed text projection head
    loss_ref,          # SMEM (1, 1)       output
    pooled_tok_ref,    # VMEM (B, 48)      scratch
):
    B, S = cap_ref.shape

    # ---- image tower: one dense 2-D MXU matmul on the pre-pooled patches ----
    img_w = img_tower_ref[0:PATCH_DIM, :]
    img_b = img_tower_ref[PATCH_DIM:PATCH_DIM + 1, :]
    image_features = (
        jnp.dot(pooled_img_ref[...], img_w, preferred_element_type=jnp.float32) + img_b
    )                                                                   # (B, 64)

    # ---- text tower: in-kernel embedding gather + mean pool + linear ----
    # TODO(synk): mean-pools over all S positions; padded captions are not masked.
    # TODO(synk): at real sequence lengths replace this scalar-indexed gather loop
    # with a tiled/vectorized gather.
    inv_s = 1.0 / S
    for b in range(B):                                    # static trip counts
        acc = tok_emb_ref[pl.ds(cap_ref[b, 0], 1), :]     # dynamic first-axis row load
        for s in range(1, S):
            acc = acc + tok_emb_ref[pl.ds(cap_ref[b, s], 1), :]
        pooled_tok_ref[b:b + 1, :] = acc * inv_s
    txt_w = txt_tower_ref[0:TOKEN_DIM, :]
    txt_b = txt_tower_ref[TOKEN_DIM:TOKEN_DIM + 1, :]
    text_features = (
        jnp.dot(pooled_tok_ref[...], txt_w, preferred_element_type=jnp.float32) + txt_b
    )                                                                   # (B, 32)

    # ---- projection heads (packed params, everything stays in VMEM/vregs) ----
    image_repr = _projection_head(image_features, img_head_ref, IMAGE_EMBEDDING)  # (B,128)
    text_repr = _projection_head(text_features, txt_head_ref, TEXT_EMBEDDING)     # (B,128)

    # ---- symmetric contrastive (CLIP) loss ----
    # Fold the temperature into ONE representation (one B*128 multiply); both logit
    # directions inherit the scale automatically.
    scale = jnp.exp(temp_ref[0, 0])
    image_repr = image_repr * scale

    dn = (((1,), (1,)), ((), ()))      # contract last dims of both operands (no .T)
    logits = lax.dot_general(image_repr, text_repr, dn,
                             preferred_element_type=jnp.float32)        # (B, B)

    # diag(logits) directly from the representations: O(B*D) lane reduce, no iota/eye.
    diag_sum = jnp.sum(image_repr * text_repr)

    # texts_loss_i  = logsumexp(logits[i, :]) - logits[i, i]   (row LSE)
    rmax = jnp.max(logits, axis=1, keepdims=True)
    lse_r = jnp.log(jnp.sum(jnp.exp(logits - rmax), axis=1, keepdims=True)) + rmax
    # images_loss_j = logsumexp(logits[:, j]) - logits[j, j]   (column LSE via axis-0
    # reductions of the SAME logits — no second dot_general, no transpose)
    cmax = jnp.max(logits, axis=0, keepdims=True)
    lse_c = jnp.log(jnp.sum(jnp.exp(logits - cmax), axis=0, keepdims=True)) + cmax

    # loss = mean_i (texts_loss_i + images_loss_i) / 2
    total = jnp.sum(lse_r) + jnp.sum(lse_c) - 2.0 * diag_sum
    loss_ref[0, 0] = total / (2.0 * B)


# --------------------------- parameter init --------------------------------
def _init_projection_head(key, embedding_dim):
    k1, k2 = jax.random.split(key)
    s = 0.02
    w1 = jax.random.normal(k1, (embedding_dim, PROJECTION_DIM), jnp.float32) * s
    w2 = jax.random.normal(k2, (PROJECTION_DIM, PROJECTION_DIM), jnp.float32) * s
    b1 = jnp.zeros((1, PROJECTION_DIM), jnp.float32)
    b2 = jnp.zeros((1, PROJECTION_DIM), jnp.float32)
    gamma = jnp.ones((1, PROJECTION_DIM), jnp.float32)
    beta = jnp.zeros((1, PROJECTION_DIM), jnp.float32)
    # Packed once at init time into a single dense VMEM operand.
    return jnp.concatenate([w1, w2, b1, b2, gamma, beta], axis=0)   # (emb+132, 128)


def init_params(key):
    keys = jax.random.split(key, 5)
    s = 0.02
    img_w = jax.random.normal(keys[0], (PATCH_DIM, IMAGE_EMBEDDING), jnp.float32) * s
    img_b = jnp.zeros((1, IMAGE_EMBEDDING), jnp.float32)
    txt_w = jax.random.normal(keys[2], (TOKEN_DIM, TEXT_EMBEDDING), jnp.float32) * s
    txt_b = jnp.zeros((1, TEXT_EMBEDDING), jnp.float32)
    return {
        "tok_emb": jax.random.normal(keys[1], (VOCAB, TOKEN_DIM), jnp.float32) * s,
        "img_tower": jnp.concatenate([img_w, img_b], axis=0),           # (193, 64)
        "txt_tower": jnp.concatenate([txt_w, txt_b], axis=0),           # (49, 32)
        "img_head": _init_projection_head(keys[3], IMAGE_EMBEDDING),    # (196, 128)
        "txt_head": _init_projection_head(keys[4], TEXT_EMBEDDING),     # (164, 128)
    }


# ------------------------------ forward ------------------------------------
def lit_forward(params, image, captions, temperature):
    assert image.shape[0] == captions.shape[0]
    B, C, H, W = image.shape
    gh, gw = H // PATCH, W // PATCH

    # Patch mean-pooling is linear, so pool in the wrapper: the kernel DMAs a dense
    # (B, 192) block instead of (B, num_patches, 192), and no 6-D transpose XLA op runs.
    pooled_img = (
        image.reshape(B, C, gh, PATCH, gw, PATCH).mean(axis=(2, 4)).reshape(B, PATCH_DIM)
    )

    temp = jnp.asarray(temperature, jnp.float32).reshape(1, 1)
    captions = captions.astype(jnp.int32)

    operands = (
        temp, captions,                                  # SMEM scalars / ids
        pooled_img, params["tok_emb"],                   # activations + resident table
        params["img_tower"], params["txt_tower"],        # packed tower weights
        params["img_head"], params["txt_head"],          # packed projection heads
    )

    smem = pl.BlockSpec(memory_space=pltpu.MemorySpace.SMEM)
    in_specs = [smem, smem] + [_full_vmem_spec(a) for a in operands[2:]]

    loss = pl.pallas_call(
        _lit_fused_kernel,
        out_shape=jax.ShapeDtypeStruct((1, 1), jnp.float32),
        in_specs=in_specs,
        out_specs=pl.BlockSpec(memory_space=pltpu.MemorySpace.SMEM),
        scratch_shapes=[pltpu.VMEM((B, TOKEN_DIM), jnp.float32)],
        compiler_params=pltpu.CompilerParams(vmem_limit_bytes=32 * 1024 * 1024),
    )(*operands)
    return loss[0, 0]


# ------------------------------ main ---------------------------------------
if __name__ == "__main__":
    key = jax.random.PRNGKey(0)
    pkey, ikey, ckey = jax.random.split(key, 3)

    params = init_params(pkey)
    B, S = 8, 8                       # B multiple of 8: fills whole sublane groups
    image = jax.random.normal(ikey, (B, 3, 16, 16), jnp.float32)     # NCHW
    captions = jax.random.randint(ckey, (B, S), 0, VOCAB, dtype=jnp.int32)

    loss = jax.jit(lit_forward)(params, image, captions, TEMPERATURE)
    jax.block_until_ready(loss)
    print("KERNEL_OK")
</pallas_src>

<mosaic_0001>
module attributes {stable_mosaic.version = 11 : i64} {
  func.func @_lit_fused_kernel(%arg0: memref<1x1xf32, #tpu.memory_space<smem>>, %arg1: memref<8x8xi32, #tpu.memory_space<smem>>, %arg2: memref<8x192xf32, #tpu.memory_space<vmem>>, %arg3: memref<128x48xf32, #tpu.memory_space<vmem>>, %arg4: memref<193x64xf32, #tpu.memory_space<vmem>>, %arg5: memref<49x32xf32, #tpu.memory_space<vmem>>, %arg6: memref<196x128xf32, #tpu.memory_space<vmem>>, %arg7: memref<164x128xf32, #tpu.memory_space<vmem>>, %arg8: memref<1x1xf32, #tpu.memory_space<smem>>, %arg9: memref<8x48xf32, #tpu.memory_space<vmem>>) attributes {dimension_semantics = [], scalar_prefetch = 0 : i64, scratch_operands = 1 : i64, tpu.core_type = #tpu.core_type<tc>} {
    %c0 = arith.constant 0 : index
    %c0_0 = arith.constant 0 : index
    %0 = vector.load %arg4[%c0, %c0_0] : memref<193x64xf32, #tpu.memory_space<vmem>>, vector<192x64xf32>
    %c192 = arith.constant 192 : index
    %c0_1 = arith.constant 0 : index
    %1 = vector.load %arg4[%c192, %c0_1] : memref<193x64xf32, #tpu.memory_space<vmem>>, vector<1x64xf32>
    %c0_2 = arith.constant 0 : index
    %c0_3 = arith.constant 0 : index
    %2 = vector.load %arg2[%c0_2, %c0_3] : memref<8x192xf32, #tpu.memory_space<vmem>>, vector<8x192xf32>
    %cst = arith.constant dense<0.000000e+00> : vector<8x64xf32>
    %3 = tpu.matmul %2, %0, %cst {dimension_numbers = #tpu.dot_dimension_numbers<[1], [0], [0], [1], [0, 0, 1, 1], [], []>} : vector<8x192xf32>, vector<192x64xf32>, vector<8x64xf32> -> vector<8x64xf32>
    %4 = vector.broadcast %1 : vector<1x64xf32> to vector<8x64xf32>
    %5 = arith.addf %3, %4 : vector<8x64xf32>
    %c0_4 = arith.constant 0 : index
    %c0_5 = arith.constant 0 : index
    %6 = memref.load %arg1[%c0_4, %c0_5] : memref<8x8xi32, #tpu.memory_space<smem>>
    %7 = arith.index_cast %6 : i32 to index
    %c0_6 = arith.constant 0 : index
    %8 = vector.load %arg3[%7, %c0_6] : memref<128x48xf32, #tpu.memory_space<vmem>>, vector<1x48xf32>
    %c0_7 = arith.constant 0 : index
    %c1 = arith.constant 1 : index
    %9 = memref.load %arg1[%c0_7, %c1] : memref<8x8xi32, #tpu.memory_space<smem>>
    %10 = arith.index_cast %9 : i32 to index
    %c0_8 = arith.constant 0 : index
    %11 = vector.load %arg3[%10, %c0_8] : memref<128x48xf32, #tpu.memory_space<vmem>>, vector<1x48xf32>
    %12 = arith.addf %8, %11 : vector<1x48xf32>
    %c0_9 = arith.constant 0 : index
    %c2 = arith.constant 2 : index
    %13 = memref.load %arg1[%c0_9, %c2] : memref<8x8xi32, #tpu.memory_space<smem>>
    %14 = arith.index_cast %13 : i32 to index
    %c0_10 = arith.constant 0 : index
    %15 = vector.load %arg3[%14, %c0_10] : memref<128x48xf32, #tpu.memory_space<vmem>>, vector<1x48xf32>
    %16 = arith.addf %12, %15 : vector<1x48xf32>
    %c0_11 = arith.constant 0 : index
    %c3 = arith.constant 3 : index
    %17 = memref.load %arg1[%c0_11, %c3] : memref<8x8xi32, #tpu.memory_space<smem>>
    %18 = arith.index_cast %17 : i32 to index
    %c0_12 = arith.constant 0 : index
    %19 = vector.load %arg3[%18, %c0_12] : memref<128x48xf32, #tpu.memory_space<vmem>>, vector<1x48xf32>
    %20 = arith.addf %16, %19 : vector<1x48xf32>
    %c0_13 = arith.constant 0 : index
    %c4 = arith.constant 4 : index
    %21 = memref.load %arg1[%c0_13, %c4] : memref<8x8xi32, #tpu.memory_space<smem>>
    %22 = arith.index_cast %21 : i32 to index
    %c0_14 = arith.constant 0 : index
    %23 = vector.load %arg3[%22, %c0_14] : memref<128x48xf32, #tpu.memory_space<vmem>>, vector<1x48xf32>
    %24 = arith.addf %20, %23 : vector<1x48xf32>
    %c0_15 = arith.constant 0 : index
    %c5 = arith.constant 5 : index
    %25 = memref.load %arg1[%c0_15, %c5] : memref<8x8xi32, #tpu.memory_space<smem>>
    %26 = arith.index_cast %25 : i32 to index
    %c0_16 = arith.constant 0 : index
    %27 = vector.load %arg3[%26, %c0_16] : memref<128x48xf32, #tpu.memory_space<vmem>>, vector<1x48xf32>
    %28 = arith.addf %24, %27 : vector<1x48xf32>
    %c0_17 = arith.constant 0 : index
    %c6 = arith.constant 6 : index
    %29 = memref.load %arg1[%c0_17, %c6] : memref<8x8xi32, #tpu.memory_space<smem>>
    %30 = arith.index_cast %29 : i32 to index
    %c0_18 = arith.constant 0 : index
    %31 = vector.load %arg3[%30, %c0_18] : memref<128x48xf32, #tpu.memory_space<vmem>>, vector<1x48xf32>
    %32 = arith.addf %28, %31 : vector<1x48xf32>
    %c0_19 = arith.constant 0 : index
    %c7 = arith.constant 7 : index
    %33 = memref.load %arg1[%c0_19, %c7] : memref<8x8xi32, #tpu.memory_space<smem>>
    %34 = arith.index_cast %33 : i32 to index
    %c0_20 = arith.constant 0 : index
    %35 = vector.load %arg3[%34, %c0_20] : memref<128x48xf32, #tpu.memory_space<vmem>>, vector<1x48xf32>
    %36 = arith.addf %32, %35 : vector<1x48xf32>
    %cst_21 = arith.constant 1.250000e-01 : f32
    %37 = vector.broadcast %cst_21 : f32 to vector<1x48xf32>
    %38 = arith.mulf %36, %37 : vector<1x48xf32>
    %c0_22 = arith.constant 0 : index
    %c0_23 = arith.constant 0 : index
    %39 = vector.load %arg9[%c0_22, %c0_23] : memref<8x48xf32, #tpu.memory_space<vmem>>, vector<1x48xf32>
    tpu.vector_store %arg9[%c0_22, %c0_23], %38 {strides = array<i32>} : memref<8x48xf32, #tpu.memory_space<vmem>>, vector<1x48xf32>,
    %c1_24 = arith.constant 1 : index
    %c0_25 = arith.constant 0 : index
    %40 = memref.load %arg1[%c1_24, %c0_25] : memref<8x8xi32, #tpu.memory_space<smem>>
    %41 = arith.index_cast %40 : i32 to index
    %c0_26 = arith.constant 0 : index
    %42 = vector.load %arg3[%41, %c0_26] : memref<128x48xf32, #tpu.memory_space<vmem>>, vector<1x48xf32>
    %c1_27 = arith.constant 1 : index
    %c1_28 = arith.constant 1 : index
    %43 = memref.load %arg1[%c1_27, %c1_28] : memref<8x8xi32, #tpu.memory_space<smem>>
    %44 = arith.index_cast %43 : i32 to index
    %c0_29 = arith.constant 0 : index
    %45 = vector.load %arg3[%44, %c0_29] : memref<128x48xf32, #tpu.memory_space<vmem>>, vector<1x48xf32>
    %46 = arith.addf %42, %45 : vector<1x48xf32>
    %c1_30 = arith.constant 1 : index
    %c2_31 = arith.constant 2 : index
    %47 = memref.load %arg1[%c1_30, %c2_31] : memref<8x8xi32, #tpu.memory_space<smem>>
    %48 = arith.index_cast %47 : i32 to index
    %c0_32 = arith.constant 0 : index
    %49 = vector.load %arg3[%48, %c0_32] : memref<128x48xf32, #tpu.memory_space<vmem>>, vector<1x48xf32>
    %50 = arith.addf %46, %49 : vector<1x48xf32>
    %c1_33 = arith.constant 1 : index
    %c3_34 = arith.constant 3 : index
    %51 = memref.load %arg1[%c1_33, %c3_34] : memref<8x8xi32, #tpu.memory_space<smem>>
    %52 = arith.index_cast %51 : i32 to index
    %c0_35 = arith.constant 0 : index
    %53 = vector.load %arg3[%52, %c0_35] : memref<128x48xf32, #tpu.memory_space<vmem>>, vector<1x48xf32>
    %54 = arith.addf %50, %53 : vector<1x48xf32>
    %c1_36 = arith.constant 1 : index
    %c4_37 = arith.constant 4 : index
    %55 = memref.load %arg1[%c1_36, %c4_37] : memref<8x8xi32, #tpu.memory_space<smem>>
    %56 = arith.index_cast %55 : i32 to index
    %c0_38 = arith.constant 0 : index
    %57 = vector.load %arg3[%56, %c0_38] : memref<128x48xf32, #tpu.memory_space<vmem>>, vector<1x48xf32>
    %58 = arith.addf %54, %57 : vector<1x48xf32>
    %c1_39 = arith.constant 1 : index
    %c5_40 = arith.constant 5 : index
    %59 = memref.load %arg1[%c1_39, %c5_40] : memref<8x8xi32, #tpu.memory_space<smem>>
    %60 = arith.index_cast %59 : i32 to index
    %c0_41 = arith.constant 0 : index
    %61 = vector.load %arg3[%60, %c0_41] : memref<128x48xf32, #tpu.memory_space<vmem>>, vector<1x48xf32>
    %62 = arith.addf %58, %61 : vector<1x48xf32>
    %c1_42 = arith.constant 1 : index
    %c6_43 = arith.constant 6 : index
    %63 = memref.load %arg1[%c1_42, %c6_43] : memref<8x8xi32, #tpu.memory_space<smem>>
    %64 = arith.index_cast %63 : i32 to index
    %c0_44 = arith.constant 0 : index
    %65 = vector.load %arg3[%64, %c0_44] : memref<128x48xf32, #tpu.memory_space<vmem>>, vector<1x48xf32>
    %66 = arith.addf %62, %65 : vector<1x48xf32>
    %c1_45 = arith.constant 1 : index
    %c7_46 = arith.constant 7 : index
    %67 = memref.load %arg1[%c1_45, %c7_46] : memref<8x8xi32, #tpu.memory_space<smem>>
    %68 = arith.index_cast %67 : i32 to index
    %c0_47 = arith.constant 0 : index
    %69 = vector.load %arg3[%68, %c0_47] : memref<128x48xf32, #tpu.memory_space<vmem>>, vector<1x48xf32>
    %70 = arith.addf %66, %69 : vector<1x48xf32>
    %cst_48 = arith.constant 1.250000e-01 : f32
    %71 = vector.broadcast %cst_48 : f32 to vector<1x48xf32>
    %72 = arith.mulf %70, %71 : vector<1x48xf32>
    %c1_49 = arith.constant 1 : index
    %c0_50 = arith.constant 0 : index
    %73 = vector.load %arg9[%c1_49, %c0_50] : memref<8x48xf32, #tpu.memory_space<vmem>>, vector<1x48xf32>
    tpu.vector_store %arg9[%c1_49, %c0_50], %72 {strides = array<i32>} : memref<8x48xf32, #tpu.memory_space<vmem>>, vector<1x48xf32>,
    %c2_51 = arith.constant 2 : index
    %c0_52 = arith.constant 0 : index
    %74 = memref.load %arg1[%c2_51, %c0_52] : memref<8x8xi32, #tpu.memory_space<smem>>
    %75 = arith.index_cast %74 : i32 to index
    %c0_53 = arith.constant 0 : index
    %76 = vector.load %arg3[%75, %c0_53] : memref<128x48xf32, #tpu.memory_space<vmem>>, vector<1x48xf32>
    %c2_54 = arith.constant 2 : index
    %c1_55 = arith.constant 1 : index
    %77 = memref.load %arg1[%c2_54, %c1_55] : memref<8x8xi32, #tpu.memory_space<smem>>
    %78 = arith.index_cast %77 : i32 to index
    %c0_56 = arith.constant 0 : index
    %79 = vector.load %arg3[%78, %c0_56] : memref<128x48xf32, #tpu.memory_space<vmem>>, vector<1x48xf32>
    %80 = arith.addf %76, %79 : vector<1x48xf32>
    %c2_57 = arith.constant 2 : index
    %c2_58 = arith.constant 2 : index
    %81 = memref.load %arg1[%c2_57, %c2_58] : memref<8x8xi32, #tpu.memory_space<smem>>
    %82 = arith.index_cast %81 : i32 to index
    %c0_59 = arith.constant 0 : index
    %83 = vector.load %arg3[%82, %c0_59] : memref<128x48xf32, #tpu.memory_space<vmem>>, vector<1x48xf32>
    %84 = arith.addf %80, %83 : vector<1x48xf32>
    %c2_60 = arith.constant 2 : index
    %c3_61 = arith.constant 3 : index
    %85 = memref.load %arg1[%c2_60, %c3_61] : memref<8x8xi32, #tpu.memory_space<smem>>
    %86 = arith.index_cast %85 : i32 to index
    %c0_62 = arith.constant 0 : index
    %87 = vector.load %arg3[%86, %c0_62] : memref<128x48xf32, #tpu.memory_space<vmem>>, vector<1x48xf32>
    %88 = arith.addf %84, %87 : vector<1x48xf32>
    %c2_63 = arith.constant 2 : index
    %c4_64 = arith.constant 4 : index
    %89 = memref.load %arg1[%c2_63, %c4_64] : memref<8x8xi32, #tpu.memory_space<smem>>
    %90 = arith.index_cast %89 : i32 to index
    %c0_65 = arith.constant 0 : index
    %91 = vector.load %arg3[%90, %c0_65] : memref<128x48xf32, #tpu.memory_space<vmem>>, vector<1x48xf32>
    %92 = arith.addf %88, %91 : vector<1x48xf32>
    %c2_66 = arith.constant 2 : index
    %c5_67 = arith.constant 5 : index
    %93 = memref.load %arg1[%c2_66, %c5_67] : memref<8x8xi32, #tpu.memory_space<smem>>
    %94 = arith.index_cast %93 : i32 to index
    %c0_68 = arith.constant 0 : index
    %95 = vector.load %arg3[%94, %c0_68] : memref<128x48xf32, #tpu.memory_space<vmem>>, vector<1x48xf32>
    %96 = arith.addf %92, %95 : vector<1x48xf32>
    %c2_69 = arith.constant 2 : index
    %c6_70 = arith.constant 6 : index
    %97 = memref.load %arg1[%c2_69, %c6_70] : memref<8x8xi32, #tpu.memory_space<smem>>
    %98 = arith.index_cast %97 : i32 to index
    %c0_71 = arith.constant 0 : index
    %99 = vector.load %arg3[%98, %c0_71] : memref<128x48xf32, #tpu.memory_space<vmem>>, vector<1x48xf32>
    %100 = arith.addf %96, %99 : vector<1x48xf32>
    %c2_72 = arith.constant 2 : index
    %c7_73 = arith.constant 7 : index
    %101 = memref.load %arg1[%c2_72, %c7_73] : memref<8x8xi32, #tpu.memory_space<smem>>
    %102 = arith.index_cast %101 : i32 to index
    %c0_74 = arith.constant 0 : index
    %103 = vector.load %arg3[%102, %c0_74] : memref<128x48xf32, #tpu.memory_space<vmem>>, vector<1x48xf32>
    %104 = arith.addf %100, %103 : vector<1x48xf32>
    %cst_75 = arith.constant 1.250000e-01 : f32
    %105 = vector.broadcast %cst_75 : f32 to vector<1x48xf32>
    %106 = arith.mulf %104, %105 : vector<1x48xf32>
    %c2_76 = arith.constant 2 : index
    %c0_77 = arith.constant 0 : index
    %107 = vector.load %arg9[%c2_76, %c0_77] : memref<8x48xf32, #tpu.memory_space<vmem>>, vector<1x48xf32>
    tpu.vector_store %arg9[%c2_76, %c0_77], %106 {strides = array<i32>} : memref<8x48xf32, #tpu.memory_space<vmem>>, vector<1x48xf32>,
    %c3_78 = arith.constant 3 : index
    %c0_79 = arith.constant 0 : index
    %108 = memref.load %arg1[%c3_78, %c0_79] : memref<8x8xi32, #tpu.memory_space<smem>>
    %109 = arith.index_cast %108 : i32 to index
    %c0_80 = arith.constant 0 : index
    %110 = vector.load %arg3[%109, %c0_80] : memref<128x48xf32, #tpu.memory_space<vmem>>, vector<1x48xf32>
    %c3_81 = arith.constant 3 : index
    %c1_82 = arith.constant 1 : index
    %111 = memref.load %arg1[%c3_81, %c1_82] : memref<8x8xi32, #tpu.memory_space<smem>>
    %112 = arith.index_cast %111 : i32 to index
    %c0_83 = arith.constant 0 : index
    %113 = vector.load %arg3[%112, %c0_83] : memref<128x48xf32, #tpu.memory_space<vmem>>, vector<1x48xf32>
    %114 = arith.addf %110, %113 : vector<1x48xf32>
    %c3_84 = arith.constant 3 : index
    %c2_85 = arith.constant 2 : index
    %115 = memref.load %arg1[%c3_84, %c2_85] : memref<8x8xi32, #tpu.memory_space<smem>>
    %116 = arith.index_cast %115 : i32 to index
    %c0_86 = arith.constant 0 : index
    %117 = vector.load %arg3[%116, %c0_86] : memref<128x48xf32, #tpu.memory_space<vmem>>, vector<1x48xf32>
    %118 = arith.addf %114, %117 : vector<1x48xf32>
    %c3_87 = arith.constant 3 : index
    %c3_88 = arith.constant 3 : index
    %119 = memref.load %arg1[%c3_87, %c3_88] : memref<8x8xi32, #tpu.memory_space<smem>>
    %120 = arith.index_cast %119 : i32 to index
    %c0_89 = arith.constant 0 : index
    %121 = vector.load %arg3[%120, %c0_89] : memref<128x48xf32, #tpu.memory_space<vmem>>, vector<1x48xf32>
    %122 = arith.addf %118, %121 : vector<1x48xf32>
    %c3_90 = arith.constant 3 : index
    %c4_91 = arith.constant 4 : index
    %123 = memref.load %arg1[%c3_90, %c4_91] : memref<8x8xi32, #tpu.memory_space<smem>>
    %124 = arith.index_cast %123 : i32 to index
    %c0_92 = arith.constant 0 : index
    %125 = vector.load %arg3[%124, %c0_92] : memref<128x48xf32, #tpu.memory_space<vmem>>, vector<1x48xf32>
    %126 = arith.addf %122, %125 : vector<1x48xf32>
    %c3_93 = arith.constant 3 : index
    %c5_94 = arith.constant 5 : index
    %127 = memref.load %arg1[%c3_93, %c5_94] : memref<8x8xi32, #tpu.memory_space<smem>>
    %128 = arith.index_cast %127 : i32 to index
    %c0_95 = arith.constant 0 : index
    %129 = vector.load %arg3[%128, %c0_95] : memref<128x48xf32, #tpu.memory_space<vmem>>, vector<1x48xf32>
    %130 = arith.addf %126, %129 : vector<1x48xf32>
    %c3_96 = arith.constant 3 : index
    %c6_97 = arith.constant 6 : index
    %131 = memref.load %arg1[%c3_96, %c6_97] : memref<8x8xi32, #tpu.memory_space<smem>>
    %132 = arith.index_cast %131 : i32 to index
    %c0_98 = arith.constant 0 : index
    %133 = vector.load %arg3[%132, %c0_98] : memref<128x48xf32, #tpu.memory_space<vmem>>, vector<1x48xf32>
    %134 = arith.addf %130, %133 : vector<1x48xf32>
    %c3_99 = arith.constant 3 : index
    %c7_100 = arith.constant 7 : index
    %135 = memref.load %arg1[%c3_99, %c7_100] : memref<8x8xi32, #tpu.memory_space<smem>>
    %136 = arith.index_cast %135 : i32 to index
    %c0_101 = arith.constant 0 : index
    %137 = vector.load %arg3[%136, %c0_101] : memref<128x48xf32, #tpu.memory_space<vmem>>, vector<1x48xf32>
    %138 = arith.addf %134, %137 : vector<1x48xf32>
    %cst_102 = arith.constant 1.250000e-01 : f32
    %139 = vector.broadcast %cst_102 : f32 to vector<1x48xf32>
    %140 = arith.mulf %138, %139 : vector<1x48xf32>
    %c3_103 = arith.constant 3 : index
    %c0_104 = arith.constant 0 : index
    %141 = vector.load %arg9[%c3_103, %c0_104] : memref<8x48xf32, #tpu.memory_space<vmem>>, vector<1x48xf32>
    tpu.vector_store %arg9[%c3_103, %c0_104], %140 {strides = array<i32>} : memref<8x48xf32, #tpu.memory_space<vmem>>, vector<1x48xf32>,
    %c4_105 = arith.constant 4 : index
    %c0_106 = arith.constant 0 : index
    %142 = memref.load %arg1[%c4_105, %c0_106] : memref<8x8xi32, #tpu.memory_space<smem>>
    %143 = arith.index_cast %142 : i32 to index
    %c0_107 = arith.constant 0 : index
    %144 = vector.load %arg3[%143, %c0_107] : memref<128x48xf32, #tpu.memory_space<vmem>>, vector<1x48xf32>
    %c4_108 = arith.constant 4 : index
    %c1_109 = arith.constant 1 : index
    %145 = memref.load %arg1[%c4_108, %c1_109] : memref<8x8xi32, #tpu.memory_space<smem>>
    %146 = arith.index_cast %145 : i32 to index
    %c0_110 = arith.constant 0 : index
    %147 = vector.load %arg3[%146, %c0_110] : memref<128x48xf32, #tpu.memory_space<vmem>>, vector<1x48xf32>
    %148 = arith.addf %144, %147 : vector<1x48xf32>
    %c4_111 = arith.constant 4 : index
    %c2_112 = arith.constant 2 : index
    %149 = memref.load %arg1[%c4_111, %c2_112] : memref<8x8xi32, #tpu.memory_space<smem>>
    %150 = arith.index_cast %149 : i32 to index
    %c0_113 = arith.constant 0 : index
    %151 = vector.load %arg3[%150, %c0_113] : memref<128x48xf32, #tpu.memory_space<vmem>>, vector<1x48xf32>
    %152 = arith.addf %148, %151 : vector<1x48xf32>
    %c4_114 = arith.constant 4 : index
    %c3_115 = arith.constant 3 : index
    %153 = memref.load %arg1[%c4_114, %c3_115] : memref<8x8xi32, #tpu.memory_space<smem>>
    %154 = arith.index_cast %153 : i32 to index
    %c0_116 = arith.constant 0 : index
    %155 = vector.load %arg3[%154, %c0_116] : memref<128x48xf32, #tpu.memory_space<vmem>>, vector<1x48xf32>
    %156 = arith.addf %152, %155 : vector<1x48xf32>
    %c4_117 = arith.constant 4 : index
    %c4_118 = arith.constant 4 : index
    %157 = memref.load %arg1[%c4_117, %c4_118] : memref<8x8xi32, #tpu.memory_space<smem>>
    %158 = arith.index_cast %157 : i32 to index
    %c0_119 = arith.constant 0 : index
    %159 = vector.load %arg3[%158, %c0_119] : memref<128x48xf32, #tpu.memory_space<vmem>>, vector<1x48xf32>
    %160 = arith.addf %156, %159 : vector<1x48xf32>
    %c4_120 = arith.constant 4 : index
    %c5_121 = arith.constant 5 : index
    %161 = memref.load %arg1[%c4_120, %c5_121] : memref<8x8xi32, #tpu.memory_space<smem>>
    %162 = arith.index_cast %161 : i32 to index
    %c0_122 = arith.constant 0 : index
    %163 = vector.load %arg3[%162, %c0_122] : memref<128x48xf32, #tpu.memory_space<vmem>>, vector<1x48xf32>
    %164 = arith.addf %160, %163 : vector<1x48xf32>
    %c4_123 = arith.constant 4 : index
    %c6_124 = arith.constant 6 : index
    %165 = memref.load %arg1[%c4_123, %c6_124] : memref<8x8xi32, #tpu.memory_space<smem>>
    %166 = arith.index_cast %165 : i32 to index
    %c0_125 = arith.constant 0 : index
    %167 = vector.load %arg3[%166, %c0_125] : memref<128x48xf32, #tpu.memory_space<vmem>>, vector<1x48xf32>
    %168 = arith.addf %164, %167 : vector<1x48xf32>
    %c4_126 = arith.constant 4 : index
    %c7_127 = arith.constant 7 : index
    %169 = memref.load %arg1[%c4_126, %c7_127] : memref<8x8xi32, #tpu.memory_space<smem>>
    %170 = arith.index_cast %169 : i32 to index
    %c0_128 = arith.constant 0 : index
    %171 = vector.load %arg3[%170, %c0_128] : memref<128x48xf32, #tpu.memory_space<vmem>>, vector<1x48xf32>
    %172 = arith.addf %168, %171 : vector<1x48xf32>
    %cst_129 = arith.constant 1.250000e-01 : f32
    %173 = vector.broadcast %cst_129 : f32 to vector<1x48xf32>
    %174 = arith.mulf %172, %173 : vector<1x48xf32>
    %c4_130 = arith.constant 4 : index
    %c0_131 = arith.constant 0 : index
    %175 = vector.load %arg9[%c4_130, %c0_131] : memref<8x48xf32, #tpu.memory_space<vmem>>, vector<1x48xf32>
    tpu.vector_store %arg9[%c4_130, %c0_131], %174 {strides = array<i32>} : memref<8x48xf32, #tpu.memory_space<vmem>>, vector<1x48xf32>,
    %c5_132 = arith.constant 5 : index
    %c0_133 = arith.constant 0 : index
    %176 = memref.load %arg1[%c5_132, %c0_133] : memref<8x8xi32, #tpu.memory_space<smem>>
    %177 = arith.index_cast %176 : i32 to index
    %c0_134 = arith.constant 0 : index
    %178 = vector.load %arg3[%177, %c0_134] : memref<128x48xf32, #tpu.memory_space<vmem>>, vector<1x48xf32>
    %c5_135 = arith.constant 5 : index
    %c1_136 = arith.constant 1 : index
    %179 = memref.load %arg1[%c5_135, %c1_136] : memref<8x8xi32, #tpu.memory_space<smem>>
    %180 = arith.index_cast %179 : i32 to index
    %c0_137 = arith.constant 0 : index
    %181 = vector.load %arg3[%180, %c0_137] : memref<128x48xf32, #tpu.memory_space<vmem>>, vector<1x48xf32>
    %182 = arith.addf %178, %181 : vector<1x48xf32>
    %c5_138 = arith.constant 5 : index
    %c2_139 = arith.constant 2 : index
    %183 = memref.load %arg1[%c5_138, %c2_139] : memref<8x8xi32, #tpu.memory_space<smem>>
    %184 = arith.index_cast %183 : i32 to index
    %c0_140 = arith.constant 0 : index
    %185 = vector.load %arg3[%184, %c0_140] : memref<128x48xf32, #tpu.memory_space<vmem>>, vector<1x48xf32>
    %186 = arith.addf %182, %185 : vector<1x48xf32>
    %c5_141 = arith.constant 5 : index
    %c3_142 = arith.constant 3 : index
    %187 = memref.load %arg1[%c5_141, %c3_142] : memref<8x8xi32, #tpu.memory_space<smem>>
    %188 = arith.index_cast %187 : i32 to index
    %c0_143 = arith.constant 0 : index
    %189 = vector.load %arg3[%188, %c0_143] : memref<128x48xf32, #tpu.memory_space<vmem>>, vector<1x48xf32>
    %190 = arith.addf %186, %189 : vector<1x48xf32>
    %c5_144 = arith.constant 5 : index
    %c4_145 = arith.constant 4 : index
    %191 = memref.load %arg1[%c5_144, %c4_145] : memref<8x8xi32, #tpu.memory_space<smem>>
    %192 = arith.index_cast %191 : i32 to index
    %c0_146 = arith.constant 0 : index
    %193 = vector.load %arg3[%192, %c0_146] : memref<128x48xf32, #tpu.memory_space<vmem>>, vector<1x48xf32>
    %194 = arith.addf %190, %193 : vector<1x48xf32>
    %c5_147 = arith.constant 5 : index
    %c5_148 = arith.constant 5 : index
    %195 = memref.load %arg1[%c5_147, %c5_148] : memref<8x8xi32, #tpu.memory_space<smem>>
    %196 = arith.index_cast %195 : i32 to index
    %c0_149 = arith.constant 0 : index
    %197 = vector.load %arg3[%196, %c0_149] : memref<128x48xf32, #tpu.memory_space<vmem>>, vector<1x48xf32>
    %198 = arith.addf %194, %197 : vector<1x48xf32>
    %c5_150 = arith.constant 5 : index
    %c6_151 = arith.constant 6 : index
    %199 = memref.load %arg1[%c5_150, %c6_151] : memref<8x8xi32, #tpu.memory_space<smem>>
    %200 = arith.index_cast %199 : i32 to index
    %c0_152 = arith.constant 0 : index
    %201 = vector.load %arg3[%200, %c0_152] : memref<128x48xf32, #tpu.memory_space<vmem>>, vector<1x48xf32>
    %202 = arith.addf %198, %201 : vector<1x48xf32>
    %c5_153 = arith.constant 5 : index
    %c7_154 = arith.constant 7 : index
    %203 = memref.load %arg1[%c5_153, %c7_154] : memref<8x8xi32, #tpu.memory_space<smem>>
    %204 = arith.index_cast %203 : i32 to index
    %c0_155 = arith.constant 0 : index
    %205 = vector.load %arg3[%204, %c0_155] : memref<128x48xf32, #tpu.memory_space<vmem>>, vector<1x48xf32>
    %206 = arith.addf %202, %205 : vector<1x48xf32>
    %cst_156 = arith.constant 1.250000e-01 : f32
    %207 = vector.broadcast %cst_156 : f32 to vector<1x48xf32>
    %208 = arith.mulf %206, %207 : vector<1x48xf32>
    %c5_157 = arith.constant 5 : index
    %c0_158 = arith.constant 0 : index
    %209 = vector.load %arg9[%c5_157, %c0_158] : memref<8x48xf32, #tpu.memory_space<vmem>>, vector<1x48xf32>
    tpu.vector_store %arg9[%c5_157, %c0_158], %208 {strides = array<i32>} : memref<8x48xf32, #tpu.memory_space<vmem>>, vector<1x48xf32>,
    %c6_159 = arith.constant 6 : index
    %c0_160 = arith.constant 0 : index
    %210 = memref.load %arg1[%c6_159, %c0_160] : memref<8x8xi32, #tpu.memory_space<smem>>
    %211 = arith.index_cast %210 : i32 to index
    %c0_161 = arith.constant 0 : index
    %212 = vector.load %arg3[%211, %c0_161] : memref<128x48xf32, #tpu.memory_space<vmem>>, vector<1x48xf32>
    %c6_162 = arith.constant 6 : index
    %c1_163 = arith.constant 1 : index
    %213 = memref.load %arg1[%c6_162, %c1_163] : memref<8x8xi32, #tpu.memory_space<smem>>
    %214 = arith.index_cast %213 : i32 to index
    %c0_164 = arith.constant 0 : index
    %215 = vector.load %arg3[%214, %c0_164] : memref<128x48xf32, #tpu.memory_space<vmem>>, vector<1x48xf32>
    %216 = arith.addf %212, %215 : vector<1x48xf32>
    %c6_165 = arith.constant 6 : index
    %c2_166 = arith.constant 2 : index
    %217 = memref.load %arg1[%c6_165, %c2_166] : memref<8x8xi32, #tpu.memory_space<smem>>
    %218 = arith.index_cast %217 : i32 to index
    %c0_167 = arith.constant 0 : index
    %219 = vector.load %arg3[%218, %c0_167] : memref<128x48xf32, #tpu.memory_space<vmem>>, vector<1x48xf32>
    %220 = arith.addf %216, %219 : vector<1x48xf32>
    %c6_168 = arith.constant 6 : index
    %c3_169 = arith.constant 3 : index
    %221 = memref.load %arg1[%c6_168, %c3_169] : memref<8x8xi32, #tpu.memory_space<smem>>
    %222 = arith.index_cast %221 : i32 to index
    %c0_170 = arith.constant 0 : index
    %223 = vector.load %arg3[%222, %c0_170] : memref<128x48xf32, #tpu.memory_space<vmem>>, vector<1x48xf32>
    %224 = arith.addf %220, %223 : vector<1x48xf32>
    %c6_171 = arith.constant 6 : index
    %c4_172 = arith.constant 4 : index
    %225 = memref.load %arg1[%c6_171, %c4_172] : memref<8x8xi32, #tpu.memory_space<smem>>
    %226 = arith.index_cast %225 : i32 to index
    %c0_173 = arith.constant 0 : index
    %227 = vector.load %arg3[%226, %c0_173] : memref<128x48xf32, #tpu.memory_space<vmem>>, vector<1x48xf32>
    %228 = arith.addf %224, %227 : vector<1x48xf32>
    %c6_174 = arith.constant 6 : index
    %c5_175 = arith.constant 5 : index
    %229 = memref.load %arg1[%c6_174, %c5_175] : memref<8x8xi32, #tpu.memory_space<smem>>
    %230 = arith.index_cast %229 : i32 to index
    %c0_176 = arith.constant 0 : index
    %231 = vector.load %arg3[%230, %c0_176] : memref<128x48xf32, #tpu.memory_space<vmem>>, vector<1x48xf32>
    %232 = arith.addf %228, %231 : vector<1x48xf32>
    %c6_177 = arith.constant 6 : index
    %c6_178 = arith.constant 6 : index
    %233 = memref.load %arg1[%c6_177, %c6_178] : memref<8x8xi32, #tpu.memory_space<smem>>
    %234 = arith.index_cast %233 : i32 to index
    %c0_179 = arith.constant 0 : index
    %235 = vector.load %arg3[%234, %c0_179] : memref<128x48xf32, #tpu.memory_space<vmem>>, vector<1x48xf32>
    %236 = arith.addf %232, %235 : vector<1x48xf32>
    %c6_180 = arith.constant 6 : index
    %c7_181 = arith.constant 7 : index
    %237 = memref.load %arg1[%c6_180, %c7_181] : memref<8x8xi32, #tpu.memory_space<smem>>
    %238 = arith.index_cast %237 : i32 to index
    %c0_182 = arith.constant 0 : index
    %239 = vector.load %arg3[%238, %c0_182] : memref<128x48xf32, #tpu.memory_space<vmem>>, vector<1x48xf32>
    %240 = arith.addf %236, %239 : vector<1x48xf32>
    %cst_183 = arith.constant 1.250000e-01 : f32
    %241 = vector.broadcast %cst_183 : f32 to vector<1x48xf32>
    %242 = arith.mulf %240, %241 : vector<1x48xf32>
    %c6_184 = arith.constant 6 : index
    %c0_185 = arith.constant 0 : index
    %243 = vector.load %arg9[%c6_184, %c0_185] : memref<8x48xf32, #tpu.memory_space<vmem>>, vector<1x48xf32>
    tpu.vector_store %arg9[%c6_184, %c0_185], %242 {strides = array<i32>} : memref<8x48xf32, #tpu.memory_space<vmem>>, vector<1x48xf32>,
    %c7_186 = arith.constant 7 : index
    %c0_187 = arith.constant 0 : index
    %244 = memref.load %arg1[%c7_186, %c0_187] : memref<8x8xi32, #tpu.memory_space<smem>>
    %245 = arith.index_cast %244 : i32 to index
    %c0_188 = arith.constant 0 : index
    %246 = vector.load %arg3[%245, %c0_188] : memref<128x48xf32, #tpu.memory_space<vmem>>, vector<1x48xf32>
    %c7_189 = arith.constant 7 : index
    %c1_190 = arith.constant 1 : index
    %247 = memref.load %arg1[%c7_189, %c1_190] : memref<8x8xi32, #tpu.memory_space<smem>>
    %248 = arith.index_cast %247 : i32 to index
    %c0_191 = arith.constant 0 : index
    %249 = vector.load %arg3[%248, %c0_191] : memref<128x48xf32, #tpu.memory_space<vmem>>, vector<1x48xf32>
    %250 = arith.addf %246, %249 : vector<1x48xf32>
    %c7_192 = arith.constant 7 : index
    %c2_193 = arith.constant 2 : index
    %251 = memref.load %arg1[%c7_192, %c2_193] : memref<8x8xi32, #tpu.memory_space<smem>>
    %252 = arith.index_cast %251 : i32 to index
    %c0_194 = arith.constant 0 : index
    %253 = vector.load %arg3[%252, %c0_194] : memref<128x48xf32, #tpu.memory_space<vmem>>, vector<1x48xf32>
    %254 = arith.addf %250, %253 : vector<1x48xf32>
    %c7_195 = arith.constant 7 : index
    %c3_196 = arith.constant 3 : index
    %255 = memref.load %arg1[%c7_195, %c3_196] : memref<8x8xi32, #tpu.memory_space<smem>>
    %256 = arith.index_cast %255 : i32 to index
    %c0_197 = arith.constant 0 : index
    %257 = vector.load %arg3[%256, %c0_197] : memref<128x48xf32, #tpu.memory_space<vmem>>, vector<1x48xf32>
    %258 = arith.addf %254, %257 : vector<1x48xf32>
    %c7_198 = arith.constant 7 : index
    %c4_199 = arith.constant 4 : index
    %259 = memref.load %arg1[%c7_198, %c4_199] : memref<8x8xi32, #tpu.memory_space<smem>>
    %260 = arith.index_cast %259 : i32 to index
    %c0_200 = arith.constant 0 : index
    %261 = vector.load %arg3[%260, %c0_200] : memref<128x48xf32, #tpu.memory_space<vmem>>, vector<1x48xf32>
    %262 = arith.addf %258, %261 : vector<1x48xf32>
    %c7_201 = arith.constant 7 : index
    %c5_202 = arith.constant 5 : index
    %263 = memref.load %arg1[%c7_201, %c5_202] : memref<8x8xi32, #tpu.memory_space<smem>>
    %264 = arith.index_cast %263 : i32 to index
    %c0_203 = arith.constant 0 : index
    %265 = vector.load %arg3[%264, %c0_203] : memref<128x48xf32, #tpu.memory_space<vmem>>, vector<1x48xf32>
    %266 = arith.addf %262, %265 : vector<1x48xf32>
    %c7_204 = arith.constant 7 : index
    %c6_205 = arith.constant 6 : index
    %267 = memref.load %arg1[%c7_204, %c6_205] : memref<8x8xi32, #tpu.memory_space<smem>>
    %268 = arith.index_cast %267 : i32 to index
    %c0_206 = arith.constant 0 : index
    %269 = vector.load %arg3[%268, %c0_206] : memref<128x48xf32, #tpu.memory_space<vmem>>, vector<1x48xf32>
    %270 = arith.addf %266, %269 : vector<1x48xf32>
    %c7_207 = arith.constant 7 : index
    %c7_208 = arith.constant 7 : index
    %271 = memref.load %arg1[%c7_207, %c7_208] : memref<8x8xi32, #tpu.memory_space<smem>>
    %272 = arith.index_cast %271 : i32 to index
    %c0_209 = arith.constant 0 : index
    %273 = vector.load %arg3[%272, %c0_209] : memref<128x48xf32, #tpu.memory_space<vmem>>, vector<1x48xf32>
    %274 = arith.addf %270, %273 : vector<1x48xf32>
    %cst_210 = arith.constant 1.250000e-01 : f32
    %275 = vector.broadcast %cst_210 : f32 to vector<1x48xf32>
    %276 = arith.mulf %274, %275 : vector<1x48xf32>
    %c7_211 = arith.constant 7 : index
    %c0_212 = arith.constant 0 : index
    %277 = vector.load %arg9[%c7_211, %c0_212] : memref<8x48xf32, #tpu.memory_space<vmem>>, vector<1x48xf32>
    tpu.vector_store %arg9[%c7_211, %c0_212], %276 {strides = array<i32>} : memref<8x48xf32, #tpu.memory_space<vmem>>, vector<1x48xf32>,
    %c0_213 = arith.constant 0 : index
    %c0_214 = arith.constant 0 : index
    %278 = vector.load %arg5[%c0_213, %c0_214] : memref<49x32xf32, #tpu.memory_space<vmem>>, vector<48x32xf32>
    %c48 = arith.constant 48 : index
    %c0_215 = arith.constant 0 : index
    %279 = vector.load %arg5[%c48, %c0_215] : memref<49x32xf32, #tpu.memory_space<vmem>>, vector<1x32xf32>
    %c0_216 = arith.constant 0 : index
    %c0_217 = arith.constant 0 : index
    %280 = vector.load %arg9[%c0_216, %c0_217] : memref<8x48xf32, #tpu.memory_space<vmem>>, vector<8x48xf32>
    %cst_218 = arith.constant dense<0.000000e+00> : vector<8x32xf32>
    %281 = tpu.matmul %280, %278, %cst_218 {dimension_numbers = #tpu.dot_dimension_numbers<[1], [0], [0], [1], [0, 0, 1, 1], [], []>} : vector<8x48xf32>, vector<48x32xf32>, vector<8x32xf32> -> vector<8x32xf32>
    %282 = vector.broadcast %279 : vector<1x32xf32> to vector<8x32xf32>
    %283 = arith.addf %281, %282 : vector<8x32xf32>
    %c0_219 = arith.constant 0 : index
    %c0_220 = arith.constant 0 : index
    %284 = vector.load %arg6[%c0_219, %c0_220] : memref<196x128xf32, #tpu.memory_space<vmem>>, vector<64x128xf32>
    %c64 = arith.constant 64 : index
    %c0_221 = arith.constant 0 : index
    %285 = vector.load %arg6[%c64, %c0_221] : memref<196x128xf32, #tpu.memory_space<vmem>>, vector<128x128xf32>
    %c192_222 = arith.constant 192 : index
    %c0_223 = arith.constant 0 : index
    %286 = vector.load %arg6[%c192_222, %c0_223] : memref<196x128xf32, #tpu.memory_space<vmem>>, vector<1x128xf32>
    %c193 = arith.constant 193 : index
    %c0_224 = arith.constant 0 : index
    %287 = vector.load %arg6[%c193, %c0_224] : memref<196x128xf32, #tpu.memory_space<vmem>>, vector<1x128xf32>
    %c194 = arith.constant 194 : index
    %c0_225 = arith.constant 0 : index
    %288 = vector.load %arg6[%c194, %c0_225] : memref<196x128xf32, #tpu.memory_space<vmem>>, vector<1x128xf32>
    %c195 = arith.constant 195 : index
    %c0_226 = arith.constant 0 : index
    %289 = vector.load %arg6[%c195, %c0_226] : memref<196x128xf32, #tpu.memory_space<vmem>>, vector<1x128xf32>
    %cst_227 = arith.constant dense<0.000000e+00> : vector<8x128xf32>
    %290 = tpu.matmul %5, %284, %cst_227 {dimension_numbers = #tpu.dot_dimension_numbers<[1], [0], [0], [1], [0, 0, 1, 1], [], []>} : vector<8x64xf32>, vector<64x128xf32>, vector<8x128xf32> -> vector<8x128xf32>
    %291 = vector.broadcast %286 : vector<1x128xf32> to vector<8x128xf32>
    %292 = arith.addf %290, %291 : vector<8x128xf32>
    %293 = arith.mulf %292, %292 : vector<8x128xf32>
    %294 = arith.mulf %292, %293 : vector<8x128xf32>
    %cst_228 = arith.constant 4.471500e-02 : f32
    %295 = vector.broadcast %cst_228 : f32 to vector<8x128xf32>
    %296 = arith.mulf %295, %294 : vector<8x128xf32>
    %297 = arith.addf %292, %296 : vector<8x128xf32>
    %cst_229 = arith.constant 0.797884583 : f32
    %298 = vector.broadcast %cst_229 : f32 to vector<8x128xf32>
    %299 = arith.mulf %298, %297 : vector<8x128xf32>
    %300 = math.tanh %299 : vector<8x128xf32>
    %cst_230 = arith.constant 1.000000e+00 : f32
    %301 = vector.broadcast %cst_230 : f32 to vector<8x128xf32>
    %302 = arith.addf %301, %300 : vector<8x128xf32>
    %cst_231 = arith.constant 5.000000e-01 : f32
    %303 = vector.broadcast %cst_231 : f32 to vector<8x128xf32>
    %304 = arith.mulf %303, %302 : vector<8x128xf32>
    %305 = arith.mulf %292, %304 : vector<8x128xf32>
    %cst_232 = arith.constant dense<0.000000e+00> : vector<8x128xf32>
    %306 = tpu.matmul %305, %285, %cst_232 {dimension_numbers = #tpu.dot_dimension_numbers<[1], [0], [0], [1], [0, 0, 1, 1], [], []>} : vector<8x128xf32>, vector<128x128xf32>, vector<8x128xf32> -> vector<8x128xf32>
    %307 = vector.broadcast %287 : vector<1x128xf32> to vector<8x128xf32>
    %308 = arith.addf %306, %307 : vector<8x128xf32>
    %309 = arith.addf %308, %292 : vector<8x128xf32>
    %cst_233 = arith.constant dense<0.000000e+00> : vector<8xf32>
    %310 = vector.multi_reduction <add>, %309, %cst_233 [1] : vector<8x128xf32> to vector<8xf32>
    %311 = vector.shape_cast %310 : vector<8xf32> to vector<8x1xf32>
    %cst_234 = arith.constant 1.280000e+02 : f32
    %312 = vector.broadcast %cst_234 : f32 to vector<8x1xf32>
    %313 = arith.divf %311, %312 : vector<8x1xf32>
    %314 = vector.broadcast %313 : vector<8x1xf32> to vector<8x128xf32>
    %315 = arith.subf %309, %314 : vector<8x128xf32>
    %316 = arith.mulf %315, %315 : vector<8x128xf32>
    %cst_235 = arith.constant dense<0.000000e+00> : vector<8xf32>
    %317 = vector.multi_reduction <add>, %316, %cst_235 [1] : vector<8x128xf32> to vector<8xf32>
    %318 = vector.shape_cast %317 : vector<8xf32> to vector<8x1xf32>
    %cst_236 = arith.constant 1.280000e+02 : f32
    %319 = vector.broadcast %cst_236 : f32 to vector<8x1xf32>
    %320 = arith.divf %318, %319 : vector<8x1xf32>
    %321 = vector.broadcast %313 : vector<8x1xf32> to vector<8x128xf32>
    %322 = arith.subf %309, %321 : vector<8x128xf32>
    %cst_237 = arith.constant 9.99999974E-6 : f32
    %323 = vector.broadcast %cst_237 : f32 to vector<8x1xf32>
    %324 = arith.addf %320, %323 : vector<8x1xf32>
    %325 = math.rsqrt %324 : vector<8x1xf32>
    %326 = vector.broadcast %325 : vector<8x1xf32> to vector<8x128xf32>
    %327 = arith.mulf %322, %326 : vector<8x128xf32>
    %328 = vector.broadcast %288 : vector<1x128xf32> to vector<8x128xf32>
    %329 = arith.mulf %327, %328 : vector<8x128xf32>
    %330 = vector.broadcast %289 : vector<1x128xf32> to vector<8x128xf32>
    %331 = arith.addf %329, %330 : vector<8x128xf32>
    %c0_238 = arith.constant 0 : index
    %c0_239 = arith.constant 0 : index
    %332 = vector.load %arg7[%c0_238, %c0_239] : memref<164x128xf32, #tpu.memory_space<vmem>>, vector<32x128xf32>
    %c32 = arith.constant 32 : index
    %c0_240 = arith.constant 0 : index
    %333 = vector.load %arg7[%c32, %c0_240] : memref<164x128xf32, #tpu.memory_space<vmem>>, vector<128x128xf32>
    %c160 = arith.constant 160 : index
    %c0_241 = arith.constant 0 : index
    %334 = vector.load %arg7[%c160, %c0_241] : memref<164x128xf32, #tpu.memory_space<vmem>>, vector<1x128xf32>
    %c161 = arith.constant 161 : index
    %c0_242 = arith.constant 0 : index
    %335 = vector.load %arg7[%c161, %c0_242] : memref<164x128xf32, #tpu.memory_space<vmem>>, vector<1x128xf32>
    %c162 = arith.constant 162 : index
    %c0_243 = arith.constant 0 : index
    %336 = vector.load %arg7[%c162, %c0_243] : memref<164x128xf32, #tpu.memory_space<vmem>>, vector<1x128xf32>
    %c163 = arith.constant 163 : index
    %c0_244 = arith.constant 0 : index
    %337 = vector.load %arg7[%c163, %c0_244] : memref<164x128xf32, #tpu.memory_space<vmem>>, vector<1x128xf32>
    %cst_245 = arith.constant dense<0.000000e+00> : vector<8x128xf32>
    %338 = tpu.matmul %283, %332, %cst_245 {dimension_numbers = #tpu.dot_dimension_numbers<[1], [0], [0], [1], [0, 0, 1, 1], [], []>} : vector<8x32xf32>, vector<32x128xf32>, vector<8x128xf32> -> vector<8x128xf32>
    %339 = vector.broadcast %334 : vector<1x128xf32> to vector<8x128xf32>
    %340 = arith.addf %338, %339 : vector<8x128xf32>
    %341 = arith.mulf %340, %340 : vector<8x128xf32>
    %342 = arith.mulf %340, %341 : vector<8x128xf32>
    %cst_246 = arith.constant 4.471500e-02 : f32
    %343 = vector.broadcast %cst_246 : f32 to vector<8x128xf32>
    %344 = arith.mulf %343, %342 : vector<8x128xf32>
    %345 = arith.addf %340, %344 : vector<8x128xf32>
    %cst_247 = arith.constant 0.797884583 : f32
    %346 = vector.broadcast %cst_247 : f32 to vector<8x128xf32>
    %347 = arith.mulf %346, %345 : vector<8x128xf32>
    %348 = math.tanh %347 : vector<8x128xf32>
    %cst_248 = arith.constant 1.000000e+00 : f32
    %349 = vector.broadcast %cst_248 : f32 to vector<8x128xf32>
    %350 = arith.addf %349, %348 : vector<8x128xf32>
    %cst_249 = arith.constant 5.000000e-01 : f32
    %351 = vector.broadcast %cst_249 : f32 to vector<8x128xf32>
    %352 = arith.mulf %351, %350 : vector<8x128xf32>
    %353 = arith.mulf %340, %352 : vector<8x128xf32>
    %cst_250 = arith.constant dense<0.000000e+00> : vector<8x128xf32>
    %354 = tpu.matmul %353, %333, %cst_250 {dimension_numbers = #tpu.dot_dimension_numbers<[1], [0], [0], [1], [0, 0, 1, 1], [], []>} : vector<8x128xf32>, vector<128x128xf32>, vector<8x128xf32> -> vector<8x128xf32>
    %355 = vector.broadcast %335 : vector<1x128xf32> to vector<8x128xf32>
    %356 = arith.addf %354, %355 : vector<8x128xf32>
    %357 = arith.addf %356, %340 : vector<8x128xf32>
    %cst_251 = arith.constant dense<0.000000e+00> : vector<8xf32>
    %358 = vector.multi_reduction <add>, %357, %cst_251 [1] : vector<8x128xf32> to vector<8xf32>
    %359 = vector.shape_cast %358 : vector<8xf32> to vector<8x1xf32>
    %cst_252 = arith.constant 1.280000e+02 : f32
    %360 = vector.broadcast %cst_252 : f32 to vector<8x1xf32>
    %361 = arith.divf %359, %360 : vector<8x1xf32>
    %362 = vector.broadcast %361 : vector<8x1xf32> to vector<8x128xf32>
    %363 = arith.subf %357, %362 : vector<8x128xf32>
    %364 = arith.mulf %363, %363 : vector<8x128xf32>
    %cst_253 = arith.constant dense<0.000000e+00> : vector<8xf32>
    %365 = vector.multi_reduction <add>, %364, %cst_253 [1] : vector<8x128xf32> to vector<8xf32>
    %366 = vector.shape_cast %365 : vector<8xf32> to vector<8x1xf32>
    %cst_254 = arith.constant 1.280000e+02 : f32
    %367 = vector.broadcast %cst_254 : f32 to vector<8x1xf32>
    %368 = arith.divf %366, %367 : vector<8x1xf32>
    %369 = vector.broadcast %361 : vector<8x1xf32> to vector<8x128xf32>
    %370 = arith.subf %357, %369 : vector<8x128xf32>
    %cst_255 = arith.constant 9.99999974E-6 : f32
    %371 = vector.broadcast %cst_255 : f32 to vector<8x1xf32>
    %372 = arith.addf %368, %371 : vector<8x1xf32>
    %373 = math.rsqrt %372 : vector<8x1xf32>
    %374 = vector.broadcast %373 : vector<8x1xf32> to vector<8x128xf32>
    %375 = arith.mulf %370, %374 : vector<8x128xf32>
    %376 = vector.broadcast %336 : vector<1x128xf32> to vector<8x128xf32>
    %377 = arith.mulf %375, %376 : vector<8x128xf32>
    %378 = vector.broadcast %337 : vector<1x128xf32> to vector<8x128xf32>
    %379 = arith.addf %377, %378 : vector<8x128xf32>
    %c0_256 = arith.constant 0 : index
    %c0_257 = arith.constant 0 : index
    %380 = memref.load %arg0[%c0_256, %c0_257] : memref<1x1xf32, #tpu.memory_space<smem>>
    %381 = math.exp %380 : f32
    %382 = vector.broadcast %381 : f32 to vector<8x128xf32>
    %383 = arith.mulf %331, %382 : vector<8x128xf32>
    %cst_258 = arith.constant dense<0.000000e+00> : vector<8x8xf32>
    %384 = tpu.matmul %383, %379, %cst_258 {dimension_numbers = #tpu.dot_dimension_numbers<[1], [1], [0], [0], [0, 0, 1, 0], [], []>} : vector<8x128xf32>, vector<8x128xf32>, vector<8x8xf32> -> vector<8x8xf32>
    %385 = arith.mulf %383, %379 : vector<8x128xf32>
    %386 = vector.shape_cast %385 : vector<8x128xf32> to vector<1x8x128xf32>
    %cst_259 = arith.constant dense<0.000000e+00> : vector<1xf32>
    %387 = vector.multi_reduction <add>, %386, %cst_259 [1, 2] : vector<1x8x128xf32> to vector<1xf32>
    %388 = vector.shape_cast %387 : vector<1xf32> to vector<1x1x1xf32>
    %389 = vector.extract %388[0, 0, 0] : f32 from vector<1x1x1xf32>
    %cst_260 = arith.constant dense<0xFF800000> : vector<8xf32>
    %390 = vector.multi_reduction <maximumf>, %384, %cst_260 [1] : vector<8x8xf32> to vector<8xf32>
    %391 = vector.shape_cast %390 : vector<8xf32> to vector<8x1xf32>
    %392 = vector.broadcast %391 : vector<8x1xf32> to vector<8x8xf32>
    %393 = arith.subf %384, %392 : vector<8x8xf32>
    %394 = math.exp %393 : vector<8x8xf32>
    %cst_261 = arith.constant dense<0.000000e+00> : vector<8xf32>
    %395 = vector.multi_reduction <add>, %394, %cst_261 [1] : vector<8x8xf32> to vector<8xf32>
    %396 = vector.shape_cast %395 : vector<8xf32> to vector<8x1xf32>
    %397 = math.log %396 : vector<8x1xf32>
    %398 = arith.addf %397, %391 : vector<8x1xf32>
    %cst_262 = arith.constant dense<0xFF800000> : vector<8xf32>
    %399 = vector.multi_reduction <maximumf>, %384, %cst_262 [0] : vector<8x8xf32> to vector<8xf32>
    %400 = vector.shape_cast %399 : vector<8xf32> to vector<1x8xf32>
    %401 = vector.broadcast %400 : vector<1x8xf32> to vector<8x8xf32>
    %402 = arith.subf %384, %401 : vector<8x8xf32>
    %403 = math.exp %402 : vector<8x8xf32>
    %cst_263 = arith.constant dense<0.000000e+00> : vector<8xf32>
    %404 = vector.multi_reduction <add>, %403, %cst_263 [0] : vector<8x8xf32> to vector<8xf32>
    %405 = vector.shape_cast %404 : vector<8xf32> to vector<1x8xf32>
    %406 = math.log %405 : vector<1x8xf32>
    %407 = arith.addf %406, %400 : vector<1x8xf32>
    %408 = vector.shape_cast %398 : vector<8x1xf32> to vector<1x8x1xf32>
    %cst_264 = arith.constant dense<0.000000e+00> : vector<1xf32>
    %409 = vector.multi_reduction <add>, %408, %cst_264 [1, 2] : vector<1x8x1xf32> to vector<1xf32>
    %410 = vector.shape_cast %409 : vector<1xf32> to vector<1x1x1xf32>
    %411 = vector.extract %410[0, 0, 0] : f32 from vector<1x1x1xf32>
    %412 = vector.shape_cast %407 : vector<1x8xf32> to vector<1x1x8xf32>
    %cst_265 = arith.constant dense<0.000000e+00> : vector<1xf32>
    %413 = vector.multi_reduction <add>, %412, %cst_265 [1, 2] : vector<1x1x8xf32> to vector<1xf32>
    %414 = vector.shape_cast %413 : vector<1xf32> to vector<1x1x1xf32>
    %415 = vector.extract %414[0, 0, 0] : f32 from vector<1x1x1xf32>
    %416 = arith.addf %411, %415 : f32
    %cst_266 = arith.constant 2.000000e+00 : f32
    %417 = arith.mulf %cst_266, %389 : f32
    %418 = arith.subf %416, %417 : f32
    %cst_267 = arith.constant 1.600000e+01 : f32
    %419 = arith.divf %418, %cst_267 : f32
    %c0_268 = arith.constant 0 : index
    %c0_269 = arith.constant 0 : index
    %420 = memref.load %arg8[%c0_268, %c0_269] : memref<1x1xf32, #tpu.memory_space<smem>>
    memref.store %419, %arg8[%c0_268, %c0_269] : memref<1x1xf32, #tpu.memory_space<smem>>
    return
  }
}

</mosaic_0001>

<llo_original>
// kernel: lit_forward.1
$region0: #{lit_forward.1}
  #allocation0 [shape = 'u32[]', space=smem, size = 0x4, offset = 0x4, fixed_abs, tag = 'smem constant byte address 0x4 - core index']
  #allocation1 [shape = 'u32[72,128]{1,0:T(1,128)}', space=vmem, size = 0x9000, scoped, tag = 'internal scratch']
  #allocation2 [shape = 'f32[8,48]{1,0:T(8,128)}', space=vmem, size = 0x1000, scoped, tag = 'scratch operand']
  #allocation3 [shape = 'f32[1,1]{1,0:T(1,128)S(6)}', space=smem, size = 0x200, scoped, tag = 'scoped memory for lit_forward.1']
  %s0 = inlined_call_operand.<no memory space> [shape: f32[1,1], index: 0, kind: input, shape index: {}]
  %s1 = inlined_call_operand.vmem [shape: s32[8,8], index: 1, kind: input, shape index: {}]
  %s2 = inlined_call_operand.vmem [shape: f32[8,192], index: 2, kind: input, shape index: {}]
  %s3 = inlined_call_operand.vmem [shape: f32[128,48], index: 3, kind: input, shape index: {}]
  %s4 = inlined_call_operand.vmem [shape: f32[193,64], index: 4, kind: input, shape index: {}]
  %s5 = inlined_call_operand.vmem [shape: f32[49,32], index: 5, kind: input, shape index: {}]
  %s6 = inlined_call_operand.vmem [shape: f32[196,128], index: 6, kind: input, shape index: {}]
  %s7 = inlined_call_operand.vmem [shape: f32[164,128], index: 7, kind: input, shape index: {}]
  %s8 = inlined_call_operand.hbm [shape: f32[1,1], index: 8, kind: output, shape index: {}]
  %s9 = sld [smem:[#allocation0]]
  $region46: #{lit_forward.1} parent=0
    _
  %s11 = ssub.s32 1, %s9
  %s12 = scalar_select 0, %s11, %s9
  %13 = sst [smem:[#allocation3]] %s0
  $region1: #{lit_forward.1} parent=0
    #allocation4 [shape = 'u8[4096]{0}', space=smem, size = 0x1000, scoped, tag = 'input window, operand 1, single buffered']
    #allocation5 [shape = 's32[1]{0}', space=sflag, size = 0x4, scoped, tag = 'scoped memory for lit_forward.1']
    #allocation6 [shape = 's32[1]{0}', space=sflag, size = 0x4, scoped, tag = 'scoped memory for lit_forward.1']
    #allocation7 [shape = 'u8[512]{0}', space=smem, size = 0x200, scoped, tag = 'output window, operand 0, single buffered']
    %14 = vsyncpa [#allocation6], 0
    %15 = vsyncpa [#allocation5], 0
    // Predicated region
    $region2: #{lit_forward.1} parent=1 // pred_check
      _
    $region3: #{lit_forward.1} parent=1 // pred_check_branch
      %17 = sbr.rel (0) target = $region5
    $region4: #{lit_forward.1} parent=1 // pred_region
      _
    $region5: #{lit_forward.1} parent=1 // pred_fallthru
      _
    // Predicated region
    $region6: #{lit_forward.1} parent=1 // pred_check
      _
    $region7: #{lit_forward.1} parent=1 // pred_check_branch
      %19 = sbr.rel (0) target = $region9
    $region8: #{lit_forward.1} parent=1 // pred_region
      %21 = vsyncadd [#allocation6], 0
      %s23 = sshll.u32 %s1, 4
      %s24 = int_to_ptr.vmem [resolvable:$true] %s23
      %26 = dma.vmem_to_smem %s24, 128, [#allocation4], [#allocation6]
    $region9: #{lit_forward.1} parent=1 // pred_fallthru
      _
    // Predicated region
    $region10: #{lit_forward.1} parent=1 // pred_check
      _
    $region11: #{lit_forward.1} parent=1 // pred_check_branch
      %28 = sbr.rel (0) target = $region13
    $region12: #{lit_forward.1} parent=1 // pred_region
      _
    $region13: #{lit_forward.1} parent=1 // pred_fallthru
      _
    // Predicated region
    $region14: #{lit_forward.1} parent=1 // pred_check
      _
    $region15: #{lit_forward.1} parent=1 // pred_check_branch
      %30 = sbr.rel (0) target = $region17
    $region16: #{lit_forward.1} parent=1 // pred_region
      _
    $region17: #{lit_forward.1} parent=1 // pred_fallthru
      _
    // Predicated region
    $region18: #{lit_forward.1} parent=1 // pred_check
      _
    $region19: #{lit_forward.1} parent=1 // pred_check_branch
      %32 = sbr.rel (0) target = $region21
    $region20: #{lit_forward.1} parent=1 // pred_region
      _
    $region21: #{lit_forward.1} parent=1 // pred_fallthru
      _
    // Predicated region
    $region22: #{lit_forward.1} parent=1 // pred_check
      _
    $region23: #{lit_forward.1} parent=1 // pred_check_branch
      %34 = sbr.rel (0) target = $region25
    $region24: #{lit_forward.1} parent=1 // pred_region
      _
    $region25: #{lit_forward.1} parent=1 // pred_fallthru
      _
    // Predicated region
    $region26: #{lit_forward.1} parent=1 // pred_check
      _
    $region27: #{lit_forward.1} parent=1 // pred_check_branch
      %36 = sbr.rel (0) target = $region29
    $region28: #{lit_forward.1} parent=1 // pred_region
      _
    $region29: #{lit_forward.1} parent=1 // pred_fallthru
      _
    // Predicated region
    $region30: #{lit_forward.1} parent=1 // pred_check
      _
    $region31: #{lit_forward.1} parent=1 // pred_check_branch
      %38 = sbr.rel (0) target = $region33
    $region32: #{lit_forward.1} parent=1 // pred_region
      _
    $region33: #{lit_forward.1} parent=1 // pred_fallthru
      _
    // Predicated region
    $region34: #{lit_forward.1} parent=1 // pred_check
      _
    $region35: #{lit_forward.1} parent=1 // pred_check_branch
      %40 = sbr.rel (0) target = $region37
    $region36: #{lit_forward.1} parent=1 // pred_region
      %42 = dma.done [#allocation6], 128
    $region37: #{lit_forward.1} parent=1 // pred_fallthru
      _
    %43 = sfence
    %v44 = vld [vmem:[%s4] sm:$0xff]
    %v45 = vld [vmem:[%s4 + $0x8] sm:$0xff]
    %v46 = vld [vmem:[%s4 + $0x10] sm:$0xff]
    %v47 = vld [vmem:[%s4 + $0x18] sm:$0xff]
    %v48 = vld [vmem:[%s4 + $0x20] sm:$0xff]
    %v49 = vld [vmem:[%s4 + $0x28] sm:$0xff]
    %v50 = vld [vmem:[%s4 + $0x30] sm:$0xff]
    %v51 = vld [vmem:[%s4 + $0x38] sm:$0xff]
    %v52 = vld [vmem:[%s4 + $0x40] sm:$0xff]
    %v53 = vld [vmem:[%s4 + $0x48] sm:$0xff]
    %v54 = vld [vmem:[%s4 + $0x50] sm:$0xff]
    %v55 = vld [vmem:[%s4 + $0x58] sm:$0xff]
    %v56 = vld [vmem:[%s4 + $0x60] sm:$0xff]
    %v57 = vld [vmem:[%s4 + $0x68] sm:$0xff]
    %v58 = vld [vmem:[%s4 + $0x70] sm:$0xff]
    %v59 = vld [vmem:[%s4 + $0x78] sm:$0xff]
    %v60 = vld [vmem:[%s4 + $0x80] sm:$0xff]
    %v61 = vld [vmem:[%s4 + $0x88] sm:$0xff]
    %v62 = vld [vmem:[%s4 + $0x90] sm:$0xff]
    %v63 = vld [vmem:[%s4 + $0x98] sm:$0xff]
    %v64 = vld [vmem:[%s4 + $0xa0] sm:$0xff]
    %v65 = vld [vmem:[%s4 + $0xa8] sm:$0xff]
    %v66 = vld [vmem:[%s4 + $0xb0] sm:$0xff]
    %v67 = vld [vmem:[%s4 + $0xb8] sm:$0xff]
    %v68 = vld [vmem:[%s4 + $0xc0] sm:$0x1]
    %v69 = vld [vmem:[%s2] sm:$0xff]
    %v70 = vld [vmem:[%s2 + $0x8] sm:$0xff]
    %v71 = vperm.slane %v68, 0
    %vm72 = vcmask 523264
    %v74 = vsel %vm72, %v70, 0
    %76 = vmatpush.msra.mxu0 %v59
    %77 = vmatpush.msra.mxu0 %v58
    %78 = vmatpush.msra.mxu0 %v57
    %79 = vmatpush.msra.mxu0 %v56
    %80 = vmatpush.msra.mxu0 %v55
    %81 = vmatpush.msra.mxu0 %v54
    %82 = vmatpush.msra.mxu0 %v53
    %83 = vmatpush.msra.mxu0 %v52
    %84 = vmatpush.msra.mxu0 %v51
    %85 = vmatpush.msra.mxu0 %v50
    %86 = vmatpush.msra.mxu0 %v49
    %87 = vmatpush.msra.mxu0 %v48
    %88 = vmatpush.msra.mxu0 %v47
    %89 = vmatpush.msra.mxu0 %v46
    %90 = vmatpush.msra.mxu0 %v45
    %91 = vmatpush.msra.mxu0 %v44
    %92 = vmatmul.f32.gmra.mxu0 %v69
    %v93 = vpop.f32.mrf.mxu0
    %v94 = vadd.f32 %v71, %v93
    %95 = vdwg.mxu0
    %96 = vmatpush.msra.mxu0 0.0
    %97 = vmatpush.msra.mxu0 0.0
    %98 = vmatpush.msra.mxu0 0.0
    %99 = vmatpush.msra.mxu0 0.0
    %100 = vmatpush.msra.mxu0 0.0
    %101 = vmatpush.msra.mxu0 0.0
    %102 = vmatpush.msra.mxu0 0.0
    %103 = vmatpush.msra.mxu0 0.0
    %104 = vmatpush.msra.mxu0 %v67
    %105 = vmatpush.msra.mxu0 %v66
    %106 = vmatpush.msra.mxu0 %v65
    %107 = vmatpush.msra.mxu0 %v64
    %108 = vmatpush.msra.mxu0 %v63
    %109 = vmatpush.msra.mxu0 %v62
    %110 = vmatpush.msra.mxu0 %v61
    %111 = vmatpush.msra.mxu0 %v60
    %112 = vmatmul.f32.gmra.mxu0 %v74
    %v113 = vpop.f32.mrf.mxu0
    %v114 = vadd.f32 %v94, %v113
    %115 = vdwg.mxu0
    %s116 = sld [smem:[#allocation4]]
    %s117 = scalar_lea.vmem %s3, %s116
    %v118 = vld [vmem:[%s117] sm:$0x1]
    %s119 = sld [smem:[#allocation4 + $0x1]]
    %s120 = scalar_lea.vmem %s3, %s119
    %v121 = vld [vmem:[%s120] sm:$0x1]
    %v122 = vadd.f32 %v118, %v121
    %s123 = sld [smem:[#allocation4 + $0x2]]
    %s124 = scalar_lea.vmem %s3, %s123
    %v125 = vld [vmem:[%s124] sm:$0x1]
    %v126 = vadd.f32 %v122, %v125
    %s127 = sld [smem:[#allocation4 + $0x3]]
    %s128 = scalar_lea.vmem %s3, %s127
    %v129 = vld [vmem:[%s128] sm:$0x1]
    %v130 = vadd.f32 %v126, %v129
    %s131 = sld [smem:[#allocation4 + $0x4]]
    %s132 = scalar_lea.vmem %s3, %s131
    %v133 = vld [vmem:[%s132] sm:$0x1]
    %v134 = vadd.f32 %v130, %v133
    %s135 = sld [smem:[#allocation4 + $0x5]]
    %s136 = scalar_lea.vmem %s3, %s135
    %v137 = vld [vmem:[%s136] sm:$0x1]
    %v138 = vadd.f32 %v134, %v137
    %s139 = sld [smem:[#allocation4 + $0x6]]
    %s140 = scalar_lea.vmem %s3, %s139
    %v141 = vld [vmem:[%s140] sm:$0x1]
    %v142 = vadd.f32 %v138, %v141
    %s143 = sld [smem:[#allocation4 + $0x7]]
    %s144 = scalar_lea.vmem %s3, %s143
    %v145 = vld [vmem:[%s144] sm:$0x1]
    %v146 = vadd.f32 %v142, %v145
    %v147 = vmul.f32 %v146, 0.125
    %vm148 = vcmask 385024
    %149 = vst.msk [vmem:[#allocation2] sm:$0x1] %vm148, %v147
    %s150 = sld [smem:[#allocation4 + $0x80]]
    %s151 = scalar_lea.vmem %s3, %s150
    %v152 = vld [vmem:[%s151] sm:$0x1]
    %s153 = sld [smem:[#allocation4 + $0x81]]
    %s154 = scalar_lea.vmem %s3, %s153
    %v155 = vld [vmem:[%s154] sm:$0x1]
    %v156 = vadd.f32 %v152, %v155
    %s157 = sld [smem:[#allocation4 + $0x82]]
    %s158 = scalar_lea.vmem %s3, %s157
    %v159 = vld [vmem:[%s158] sm:$0x1]
    %v160 = vadd.f32 %v156, %v159
    %s161 = sld [smem:[#allocation4 + $0x83]]
    %s162 = scalar_lea.vmem %s3, %s161
    %v163 = vld [vmem:[%s162] sm:$0x1]
    %v164 = vadd.f32 %v160, %v163
    %s165 = sld [smem:[#allocation4 + $0x84]]
    %s166 = scalar_lea.vmem %s3, %s165
    %v167 = vld [vmem:[%s166] sm:$0x1]
    %v168 = vadd.f32 %v164, %v167
    %s169 = sld [smem:[#allocation4 + $0x85]]
    %s170 = scalar_lea.vmem %s3, %s169
    %v171 = vld [vmem:[%s170] sm:$0x1]
    %v172 = vadd.f32 %v168, %v171
    %s173 = sld [smem:[#allocation4 + $0x86]]
    %s174 = scalar_lea.vmem %s3, %s173
    %v175 = vld [vmem:[%s174] sm:$0x1]
    %v176 = vadd.f32 %v172, %v175
    %s177 = sld [smem:[#allocation4 + $0x87]]
    %s178 = scalar_lea.vmem %s3, %s177
    %v179 = vld [vmem:[%s178] sm:$0x1]
    %v180 = vadd.f32 %v176, %v179
    %v181 = vmul.f32 %v180, 0.125
    %182 = vst.msk [vmem:[#allocation2 + $0x1] sm:$0x1] %vm148, %v181
    %s183 = sld [smem:[#allocation4 + $0x100]]
    %s184 = scalar_lea.vmem %s3, %s183
    %v185 = vld [vmem:[%s184] sm:$0x1]
    %s186 = sld [smem:[#allocation4 + $0x101]]
    %s187 = scalar_lea.vmem %s3, %s186
    %v188 = vld [vmem:[%s187] sm:$0x1]
    %v189 = vadd.f32 %v185, %v188
    %s190 = sld [smem:[#allocation4 + $0x102]]
    %s191 = scalar_lea.vmem %s3, %s190
    %v192 = vld [vmem:[%s191] sm:$0x1]
    %v193 = vadd.f32 %v189, %v192
    %s194 = sld [smem:[#allocation4 + $0x103]]
    %s195 = scalar_lea.vmem %s3, %s194
    %v196 = vld [vmem:[%s195] sm:$0x1]
    %v197 = vadd.f32 %v193, %v196
    %s198 = sld [smem:[#allocation4 + $0x104]]
    %s199 = scalar_lea.vmem %s3, %s198
    %v200 = vld [vmem:[%s199] sm:$0x1]
    %v201 = vadd.f32 %v197, %v200
    %s202 = sld [smem:[#allocation4 + $0x105]]
    %s203 = scalar_lea.vmem %s3, %s202
    %v204 = vld [vmem:[%s203] sm:$0x1]
    %v205 = vadd.f32 %v201, %v204
    %s206 = sld [smem:[#allocation4 + $0x106]]
    %s207 = scalar_lea.vmem %s3, %s206
    %v208 = vld [vmem:[%s207] sm:$0x1]
    %v209 = vadd.f32 %v205, %v208
    %s210 = sld [smem:[#allocation4 + $0x107]]
    %s211 = scalar_lea.vmem %s3, %s210
    %v212 = vld [vmem:[%s211] sm:$0x1]
    %v213 = vadd.f32 %v209, %v212
    %v214 = vmul.f32 %v213, 0.125
    %215 = vst.msk [vmem:[#allocation2 + $0x2] sm:$0x1] %vm148, %v214
    %s216 = sld [smem:[#allocation4 + $0x180]]
    %s217 = scalar_lea.vmem %s3, %s216
    %v218 = vld [vmem:[%s217] sm:$0x1]
    %s219 = sld [smem:[#allocation4 + $0x181]]
    %s220 = scalar_lea.vmem %s3, %s219
    %v221 = vld [vmem:[%s220] sm:$0x1]
    %v222 = vadd.f32 %v218, %v221
    %s223 = sld [smem:[#allocation4 + $0x182]]
    %s224 = scalar_lea.vmem %s3, %s223
    %v225 = vld [vmem:[%s224] sm:$0x1]
    %v226 = vadd.f32 %v222, %v225
    %s227 = sld [smem:[#allocation4 + $0x183]]
    %s228 = scalar_lea.vmem %s3, %s227
    %v229 = vld [vmem:[%s228] sm:$0x1]
    %v230 = vadd.f32 %v226, %v229
    %s231 = sld [smem:[#allocation4 + $0x184]]
    %s232 = scalar_lea.vmem %s3, %s231
    %v233 = vld [vmem:[%s232] sm:$0x1]
    %v234 = vadd.f32 %v230, %v233
    %s235 = sld [smem:[#allocation4 + $0x185]]
    %s236 = scalar_lea.vmem %s3, %s235
    %v237 = vld [vmem:[%s236] sm:$0x1]
    %v238 = vadd.f32 %v234, %v237
    %s239 = sld [smem:[#allocation4 + $0x186]]
    %s240 = scalar_lea.vmem %s3, %s239
    %v241 = vld [vmem:[%s240] sm:$0x1]
    %v242 = vadd.f32 %v238, %v241
    %s243 = sld [smem:[#allocation4 + $0x187]]
    %s244 = scalar_lea.vmem %s3, %s243
    %v245 = vld [vmem:[%s244] sm:$0x1]
    %v246 = vadd.f32 %v242, %v245
    %v247 = vmul.f32 %v246, 0.125
    %248 = vst.msk [vmem:[#allocation2 + $0x3] sm:$0x1] %vm148, %v247
    %s249 = sld [smem:[#allocation4 + $0x200]]
    %s250 = scalar_lea.vmem %s3, %s249
    %v251 = vld [vmem:[%s250] sm:$0x1]
    %s252 = sld [smem:[#allocation4 + $0x201]]
    %s253 = scalar_lea.vmem %s3, %s252
    %v254 = vld [vmem:[%s253] sm:$0x1]
    %v255 = vadd.f32 %v251, %v254
    %s256 = sld [smem:[#allocation4 + $0x202]]
    %s257 = scalar_lea.vmem %s3, %s256
    %v258 = vld [vmem:[%s257] sm:$0x1]
    %v259 = vadd.f32 %v255, %v258
    %s260 = sld [smem:[#allocation4 + $0x203]]
    %s261 = scalar_lea.vmem %s3, %s260
    %v262 = vld [vmem:[%s261] sm:$0x1]
    %v263 = vadd.f32 %v259, %v262
    %s264 = sld [smem:[#allocation4 + $0x204]]
    %s265 = scalar_lea.vmem %s3, %s264
    %v266 = vld [vmem:[%s265] sm:$0x1]
    %v267 = vadd.f32 %v263, %v266
    %s268 = sld [smem:[#allocation4 + $0x205]]
    %s269 = scalar_lea.vmem %s3, %s268
    %v270 = vld [vmem:[%s269] sm:$0x1]
    %v271 = vadd.f32 %v267, %v270
    %s272 = sld [smem:[#allocation4 + $0x206]]
    %s273 = scalar_lea.vmem %s3, %s272
    %v274 = vld [vmem:[%s273] sm:$0x1]
    %v275 = vadd.f32 %v271, %v274
    %s276 = sld [smem:[#allocation4 + $0x207]]
    %s277 = scalar_lea.vmem %s3, %s276
    %v278 = vld [vmem:[%s277] sm:$0x1]
    %v279 = vadd.f32 %v275, %v278
    %v280 = vmul.f32 %v279, 0.125
    %281 = vst.msk [vmem:[#allocation2 + $0x4] sm:$0x1] %vm148, %v280
    %s282 = sld [smem:[#allocation4 + $0x280]]
    %s283 = scalar_lea.vmem %s3, %s282
    %v284 = vld [vmem:[%s283] sm:$0x1]
    %s285 = sld [smem:[#allocation4 + $0x281]]
    %s286 = scalar_lea.vmem %s3, %s285
    %v287 = vld [vmem:[%s286] sm:$0x1]
    %v288 = vadd.f32 %v284, %v287
    %s289 = sld [smem:[#allocation4 + $0x282]]
    %s290 = scalar_lea.vmem %s3, %s289
    %v291 = vld [vmem:[%s290] sm:$0x1]
    %v292 = vadd.f32 %v288, %v291
    %s293 = sld [smem:[#allocation4 + $0x283]]
    %s294 = scalar_lea.vmem %s3, %s293
    %v295 = vld [vmem:[%s294] sm:$0x1]
    %v296 = vadd.f32 %v292, %v295
    %s297 = sld [smem:[#allocation4 + $0x284]]
    %s298 = scalar_lea.vmem %s3, %s297
    %v299 = vld [vmem:[%s298] sm:$0x1]
    %v300 = vadd.f32 %v296, %v299
    %s301 = sld [smem:[#allocation4 + $0x285]]
    %s302 = scalar_lea.vmem %s3, %s301
    %v303 = vld [vmem:[%s302] sm:$0x1]
    %v304 = vadd.f32 %v300, %v303
    %s305 = sld [smem:[#allocation4 + $0x286]]
    %s306 = scalar_lea.vmem %s3, %s305
    %v307 = vld [vmem:[%s306] sm:$0x1]
    %v308 = vadd.f32 %v304, %v307
    %s309 = sld [smem:[#allocation4 + $0x287]]
    %s310 = scalar_lea.vmem %s3, %s309
    %v311 = vld [vmem:[%s310] sm:$0x1]
    %v312 = vadd.f32 %v308, %v311
    %v313 = vmul.f32 %v312, 0.125
    %314 = vst.msk [vmem:[#allocation2 + $0x5] sm:$0x1] %vm148, %v313
    %s315 = sld [smem:[#allocation4 + $0x300]]
    %s316 = scalar_lea.vmem %s3, %s315
    %v317 = vld [vmem:[%s316] sm:$0x1]
    %s318 = sld [smem:[#allocation4 + $0x301]]
    %s319 = scalar_lea.vmem %s3, %s318
    %v320 = vld [vmem:[%s319] sm:$0x1]
    %v321 = vadd.f32 %v317, %v320
    %s322 = sld [smem:[#allocation4 + $0x302]]
    %s323 = scalar_lea.vmem %s3, %s322
    %v324 = vld [vmem:[%s323] sm:$0x1]
    %v325 = vadd.f32 %v321, %v324
    %s326 = sld [smem:[#allocation4 + $0x303]]
    %s327 = scalar_lea.vmem %s3, %s326
    %v328 = vld [vmem:[%s327] sm:$0x1]
    %v329 = vadd.f32 %v325, %v328
    %s330 = sld [smem:[#allocation4 + $0x304]]
    %s331 = scalar_lea.vmem %s3, %s330
    %v332 = vld [vmem:[%s331] sm:$0x1]
    %v333 = vadd.f32 %v329, %v332
    %s334 = sld [smem:[#allocation4 + $0x305]]
    %s335 = scalar_lea.vmem %s3, %s334
    %v336 = vld [vmem:[%s335] sm:$0x1]
    %v337 = vadd.f32 %v333, %v336
    %s338 = sld [smem:[#allocation4 + $0x306]]
    %s339 = scalar_lea.vmem %s3, %s338
    %v340 = vld [vmem:[%s339] sm:$0x1]
    %v341 = vadd.f32 %v337, %v340
    %s342 = sld [smem:[#allocation4 + $0x307]]
    %s343 = scalar_lea.vmem %s3, %s342
    %v344 = vld [vmem:[%s343] sm:$0x1]
    %v345 = vadd.f32 %v341, %v344
    %v346 = vmul.f32 %v345, 0.125
    %347 = vst.msk [vmem:[#allocation2 + $0x6] sm:$0x1] %vm148, %v346
    %s348 = sld [smem:[#allocation4 + $0x380]]
    %s349 = scalar_lea.vmem %s3, %s348
    %v350 = vld [vmem:[%s349] sm:$0x1]
    %s351 = sld [smem:[#allocation4 + $0x381]]
    %s352 = scalar_lea.vmem %s3, %s351
    %v353 = vld [vmem:[%s352] sm:$0x1]
    %v354 = vadd.f32 %v350, %v353
    %s355 = sld [smem:[#allocation4 + $0x382]]
    %s356 = scalar_lea.vmem %s3, %s355
    %v357 = vld [vmem:[%s356] sm:$0x1]
    %v358 = vadd.f32 %v354, %v357
    %s359 = sld [smem:[#allocation4 + $0x383]]
    %s360 = scalar_lea.vmem %s3, %s359
    %v361 = vld [vmem:[%s360] sm:$0x1]
    %v362 = vadd.f32 %v358, %v361
    %s363 = sld [smem:[#allocation4 + $0x384]]
    %s364 = scalar_lea.vmem %s3, %s363
    %v365 = vld [vmem:[%s364] sm:$0x1]
    %v366 = vadd.f32 %v362, %v365
    %s367 = sld [smem:[#allocation4 + $0x385]]
    %s368 = scalar_lea.vmem %s3, %s367
    %v369 = vld [vmem:[%s368] sm:$0x1]
    %v370 = vadd.f32 %v366, %v369
    %s371 = sld [smem:[#allocation4 + $0x386]]
    %s372 = scalar_lea.vmem %s3, %s371
    %v373 = vld [vmem:[%s372] sm:$0x1]
    %v374 = vadd.f32 %v370, %v373
    %s375 = sld [smem:[#allocation4 + $0x387]]
    %s376 = scalar_lea.vmem %s3, %s375
    %v377 = vld [vmem:[%s376] sm:$0x1]
    %v378 = vadd.f32 %v374, %v377
    %v379 = vmul.f32 %v378, 0.125
    %380 = vst.msk [vmem:[#allocation2 + $0x7] sm:$0x1] %vm148, %v379
    %v381 = vld [vmem:[%s5] sm:$0xff]
    %v382 = vld [vmem:[%s5 + $0x8] sm:$0xff]
    %v383 = vld [vmem:[%s5 + $0x10] sm:$0xff]
    %v384 = vld [vmem:[%s5 + $0x18] sm:$0xff]
    %v385 = vld [vmem:[%s5 + $0x20] sm:$0xff]
    %v386 = vld [vmem:[%s5 + $0x28] sm:$0xff]
    %v387 = vld [vmem:[%s5 + $0x30] sm:$0x1]
    %v388 = vld [vmem:[#allocation2] sm:$0xff]
    %v389 = vperm.slane %v387, 0
    %vm390 = vcmask 392192
    %v392 = vsel %vm390, %v388, 0
    %394 = vmatpush.msra.mxu0 0.0
    %395 = vmatpush.msra.mxu0 0.0
    %396 = vmatpush.msra.mxu0 0.0
    %397 = vmatpush.msra.mxu0 0.0
    %398 = vmatpush.msra.mxu0 0.0
    %399 = vmatpush.msra.mxu0 0.0
    %400 = vmatpush.msra.mxu0 0.0
    %401 = vmatpush.msra.mxu0 0.0
    %402 = vmatpush.msra.mxu0 0.0
    %403 = vmatpush.msra.mxu0 0.0
    %404 = vmatpush.msra.mxu0 %v386
    %405 = vmatpush.msra.mxu0 %v385
    %406 = vmatpush.msra.mxu0 %v384
    %407 = vmatpush.msra.mxu0 %v383
    %408 = vmatpush.msra.mxu0 %v382
    %409 = vmatpush.msra.mxu0 %v381
    %410 = vmatmul.f32.gmra.mxu0 %v392
    %v411 = vpop.f32.mrf.mxu0
    %v412 = vadd.f32 %v389, %v411
    %413 = vdwg.mxu0
    %v414 = vld [vmem:[%s6] sm:$0xff]
    %v415 = vld [vmem:[%s6 + $0x8] sm:$0xff]
    %v416 = vld [vmem:[%s6 + $0x10] sm:$0xff]
    %v417 = vld [vmem:[%s6 + $0x18] sm:$0xff]
    %v418 = vld [vmem:[%s6 + $0x20] sm:$0xff]
    %v419 = vld [vmem:[%s6 + $0x28] sm:$0xff]
    %v420 = vld [vmem:[%s6 + $0x30] sm:$0xff]
    %v421 = vld [vmem:[%s6 + $0x38] sm:$0xff]
    %v422 = vld [vmem:[%s6 + $0x40] sm:$0xff]
    %v423 = vld [vmem:[%s6 + $0x48] sm:$0xff]
    %v424 = vld [vmem:[%s6 + $0x50] sm:$0xff]
    %v425 = vld [vmem:[%s6 + $0x58] sm:$0xff]
    %v426 = vld [vmem:[%s6 + $0x60] sm:$0xff]
    %v427 = vld [vmem:[%s6 + $0x68] sm:$0xff]
    %v428 = vld [vmem:[%s6 + $0x70] sm:$0xff]
    %v429 = vld [vmem:[%s6 + $0x78] sm:$0xff]
    %v430 = vld [vmem:[%s6 + $0x80] sm:$0xff]
    %v431 = vld [vmem:[%s6 + $0x88] sm:$0xff]
    %v432 = vld [vmem:[%s6 + $0x90] sm:$0xff]
    %v433 = vld [vmem:[%s6 + $0x98] sm:$0xff]
    %v434 = vld [vmem:[%s6 + $0xa0] sm:$0xff]
    %v435 = vld [vmem:[%s6 + $0xa8] sm:$0xff]
    %v436 = vld [vmem:[%s6 + $0xb0] sm:$0xff]
    %v437 = vld [vmem:[%s6 + $0xb8] sm:$0xff]
    %v438 = vld [vmem:[%s6 + $0xc0] sm:$0x1]
    %v439 = vld [vmem:[%s6 + $0xc1] sm:$0x1]
    %v440 = vld [vmem:[%s6 + $0xc2] sm:$0x1]
    %v441 = vld [vmem:[%s6 + $0xc3] sm:$0x1]
    %v442 = vperm.slane %v438, 0
    %v444 = vsel %vm72, %v114, 0
    %446 = vmatpush.msra.mxu0 0.0
    %447 = vmatpush.msra.mxu0 0.0
    %448 = vmatpush.msra.mxu0 0.0
    %449 = vmatpush.msra.mxu0 0.0
    %450 = vmatpush.msra.mxu0 0.0
    %451 = vmatpush.msra.mxu0 0.0
    %452 = vmatpush.msra.mxu0 0.0
    %453 = vmatpush.msra.mxu0 0.0
    %454 = vmatpush.msra.mxu0 %v421
    %455 = vmatpush.msra.mxu0 %v420
    %456 = vmatpush.msra.mxu0 %v419
    %457 = vmatpush.msra.mxu0 %v418
    %458 = vmatpush.msra.mxu0 %v417
    %459 = vmatpush.msra.mxu0 %v416
    %460 = vmatpush.msra.mxu0 %v415
    %461 = vmatpush.msra.mxu0 %v414
    %462 = vmatmul.f32.gmra.mxu0 %v444
    %v463 = vpop.f32.mrf.mxu0
    %v464 = vadd.f32 %v442, %v463
    %465 = vdwg.mxu0
    %v466 = vmul.f32 %v464, %v464
    %v467 = vmul.f32 %v464, %v466
    %v468 = vmul.f32 %v467, 0.044715
    %v469 = vadd.f32 %v464, %v468
    %v470 = vmul.f32 %v469, 0.7978846
    %v471 = vtanh.pop %v470
    %v472 = vadd.f32 %v471, 1.0
    %v473 = vmul.f32 %v472, 0.5
    %v474 = vmul.f32 %v464, %v473
    %v475 = vperm.slane %v439, 0
    %476 = vmatpush.msra.mxu0 %v437
    %477 = vmatpush.msra.mxu0 %v436
    %478 = vmatpush.msra.mxu0 %v435
    %479 = vmatpush.msra.mxu0 %v434
    %480 = vmatpush.msra.mxu0 %v433
    %481 = vmatpush.msra.mxu0 %v432
    %482 = vmatpush.msra.mxu0 %v431
    %483 = vmatpush.msra.mxu0 %v430
    %484 = vmatpush.msra.mxu0 %v429
    %485 = vmatpush.msra.mxu0 %v428
    %486 = vmatpush.msra.mxu0 %v427
    %487 = vmatpush.msra.mxu0 %v426
    %488 = vmatpush.msra.mxu0 %v425
    %489 = vmatpush.msra.mxu0 %v424
    %490 = vmatpush.msra.mxu0 %v423
    %491 = vmatpush.msra.mxu0 %v422
    %492 = vmatmul.f32.gmra.mxu0 %v474
    %v493 = vpop.f32.mrf.mxu0
    %v494 = vadd.f32 %v475, %v493
    %495 = vdwg.mxu0
    %v496 = vadd.f32 %v494, %v464
    %497 = vadd.xlane.f32.xlu0 %v496
    %v498 = vpop.xlane.xlu0 %497
    %v499 = vrcp.pop 128.0
    %v500 = vmul.f32 128.0, %v499
    %v501 = vsub.f32 1.0, %v500
    %v502 = vmul.f32 %v499, %v501
    %v503 = vadd.f32 %v499, %v502
    %vm504 = vweird.f32 %v499
    %v505 = vsel %vm504, %v499, %v503
    %v506 = vmul.f32 %v498, %v505
    %v507 = vsub.f32 %v496, %v506
    %v508 = vmul.f32 %v507, %v507
    %509 = vadd.xlane.f32.xlu0 %v508
    %v510 = vpop.xlane.xlu0 %509
    %v511 = vmul.f32 %v510, %v505
    %v512 = vadd.f32 %v511, 1e-05
    %v513 = vrsqrt.pop %v512
    %v514 = vmul.f32 %v513, %v512
    %v515 = vmul.f32 %v514, %v513
    %v516 = vmul.f32 0.5, %v515
    %v517 = vsub.f32 1.5, %v516
    %v518 = vmul.f32 %v513, %v517
    %vm519 = vweird.f32 %v512
    %vm520 = vweird.f32 %v513
    %vm521 = vmor %vm519, %vm520
    %v522 = vsel %vm521, %v513, %v518
    %v523 = vmul.f32 %v507, %v522
    %v524 = vperm.slane %v440, 0
    %v525 = vmul.f32 %v523, %v524
    %v526 = vperm.slane %v441, 0
    %v527 = vadd.f32 %v525, %v526
    %v528 = vld [vmem:[%s7] sm:$0xff]
    %v529 = vld [vmem:[%s7 + $0x8] sm:$0xff]
    %v530 = vld [vmem:[%s7 + $0x10] sm:$0xff]
    %v531 = vld [vmem:[%s7 + $0x18] sm:$0xff]
    %v532 = vld [vmem:[%s7 + $0x20] sm:$0xff]
    %v533 = vld [vmem:[%s7 + $0x28] sm:$0xff]
    %v534 = vld [vmem:[%s7 + $0x30] sm:$0xff]
    %v535 = vld [vmem:[%s7 + $0x38] sm:$0xff]
    %v536 = vld [vmem:[%s7 + $0x40] sm:$0xff]
    %v537 = vld [vmem:[%s7 + $0x48] sm:$0xff]
    %v538 = vld [vmem:[%s7 + $0x50] sm:$0xff]
    %v539 = vld [vmem:[%s7 + $0x58] sm:$0xff]
    %v540 = vld [vmem:[%s7 + $0x60] sm:$0xff]
    %v541 = vld [vmem:[%s7 + $0x68] sm:$0xff]
    %v542 = vld [vmem:[%s7 + $0x70] sm:$0xff]
    %v543 = vld [vmem:[%s7 + $0x78] sm:$0xff]
    %v544 = vld [vmem:[%s7 + $0x80] sm:$0xff]
    %v545 = vld [vmem:[%s7 + $0x88] sm:$0xff]
    %v546 = vld [vmem:[%s7 + $0x90] sm:$0xff]
    %v547 = vld [vmem:[%s7 + $0x98] sm:$0xff]
    %v548 = vld [vmem:[%s7 + $0xa0] sm:$0x1]
    %v549 = vld [vmem:[%s7 + $0xa1] sm:$0x1]
    %v550 = vld [vmem:[%s7 + $0xa2] sm:$0x1]
    %v551 = vld [vmem:[%s7 + $0xa3] sm:$0x1]
    %v552 = vperm.slane %v548, 0
    %vm553 = vcmask 261120
    %v555 = vsel %vm553, %v412, 0
    %557 = vmatpush.msra.mxu0 0.0
    %558 = vmatpush.msra.mxu0 0.0
    %559 = vmatpush.msra.mxu0 0.0
    %560 = vmatpush.msra.mxu0 0.0
    %561 = vmatpush.msra.mxu0 0.0
    %562 = vmatpush.msra.mxu0 0.0
    %563 = vmatpush.msra.mxu0 0.0
    %564 = vmatpush.msra.mxu0 0.0
    %565 = vmatpush.msra.mxu0 0.0
    %566 = vmatpush.msra.mxu0 0.0
    %567 = vmatpush.msra.mxu0 0.0
    %568 = vmatpush.msra.mxu0 0.0
    %569 = vmatpush.msra.mxu0 %v531
    %570 = vmatpush.msra.mxu0 %v530
    %571 = vmatpush.msra.mxu0 %v529
    %572 = vmatpush.msra.mxu0 %v528
    %573 = vmatmul.f32.gmra.mxu0 %v555
    %v574 = vpop.f32.mrf.mxu0
    %v575 = vadd.f32 %v552, %v574
    %576 = vdwg.mxu0
    %v577 = vmul.f32 %v575, %v575
    %v578 = vmul.f32 %v575, %v577
    %v579 = vmul.f32 %v578, 0.044715
    %v580 = vadd.f32 %v575, %v579
    %v581 = vmul.f32 %v580, 0.7978846
    %v582 = vtanh.pop %v581
    %v583 = vadd.f32 %v582, 1.0
    %v584 = vmul.f32 %v583, 0.5
    %v585 = vmul.f32 %v575, %v584
    %v586 = vperm.slane %v549, 0
    %587 = vmatpush.msra.mxu0 %v547
    %588 = vmatpush.msra.mxu0 %v546
    %589 = vmatpush.msra.mxu0 %v545
    %590 = vmatpush.msra.mxu0 %v544
    %591 = vmatpush.msra.mxu0 %v543
    %592 = vmatpush.msra.mxu0 %v542
    %593 = vmatpush.msra.mxu0 %v541
    %594 = vmatpush.msra.mxu0 %v540
    %595 = vmatpush.msra.mxu0 %v539
    %596 = vmatpush.msra.mxu0 %v538
    %597 = vmatpush.msra.mxu0 %v537
    %598 = vmatpush.msra.mxu0 %v536
    %599 = vmatpush.msra.mxu0 %v535
    %600 = vmatpush.msra.mxu0 %v534
    %601 = vmatpush.msra.mxu0 %v533
    %602 = vmatpush.msra.mxu0 %v532
    %603 = vmatmul.f32.gmra.mxu0 %v585
    %v604 = vpop.f32.mrf.mxu0
    %v605 = vadd.f32 %v586, %v604
    %606 = vdwg.mxu0
    %v607 = vadd.f32 %v605, %v575
    %608 = vadd.xlane.f32.xlu0 %v607
    %v609 = vpop.xlane.xlu0 %608
    %v610 = vmul.f32 %v609, %v505
    %v611 = vsub.f32 %v607, %v610
    %v612 = vmul.f32 %v611, %v611
    %613 = vadd.xlane.f32.xlu0 %v612
    %v614 = vpop.xlane.xlu0 %613
    %v615 = vmul.f32 %v614, %v505
    %v616 = vadd.f32 %v615, 1e-05
    %v617 = vrsqrt.pop %v616
    %v618 = vmul.f32 %v617, %v616
    %v619 = vmul.f32 %v618, %v617
    %v620 = vmul.f32 0.5, %v619
    %v621 = vsub.f32 1.5, %v620
    %v622 = vmul.f32 %v617, %v621
    %vm623 = vweird.f32 %v616
    %vm624 = vweird.f32 %v617
    %vm625 = vmor %vm623, %vm624
    %v626 = vsel %vm625, %v617, %v622
    %v627 = vmul.f32 %v611, %v626
    %v628 = vperm.slane %v550, 0
    %v629 = vmul.f32 %v627, %v628
    %v630 = vperm.slane %v551, 0
    %v631 = vadd.f32 %v629, %v630
    %s632 = sld [smem:[#allocation3]]
    %v633 = vstv %s632
    %v634 = vmul.f32 %v633, 1.442695
    %v635 = vpow.pop %v634
    %s636 = vtos %v635
    %v637 = vstv %s636
    %v638 = vmul.f32 %v527, %v637
    %639 = vmatpush.xpose.msra.mxu0 0.0
    %640 = vmatpush.xpose.msra.mxu0 0.0
    %641 = vmatpush.xpose.msra.mxu0 0.0
    %642 = vmatpush.xpose.msra.mxu0 0.0
    %643 = vmatpush.xpose.msra.mxu0 0.0
    %644 = vmatpush.xpose.msra.mxu0 0.0
    %645 = vmatpush.xpose.msra.mxu0 0.0
    %646 = vmatpush.xpose.msra.mxu0 0.0
    %647 = vmatpush.xpose.msra.mxu0 0.0
    %648 = vmatpush.xpose.msra.mxu0 0.0
    %649 = vmatpush.xpose.msra.mxu0 0.0
    %650 = vmatpush.xpose.msra.mxu0 0.0
    %651 = vmatpush.xpose.msra.mxu0 0.0
    %652 = vmatpush.xpose.msra.mxu0 0.0
    %653 = vmatpush.xpose.msra.mxu0 0.0
    %654 = vmatpush.xpose.msra.mxu0 %v631
    %655 = vmatmul.f32.gmra.mxu0 %v638
    %v656 = vpop.f32.mrf.mxu0
    %v657 = vadd.f32 0.0, %v656
    %658 = vdwg.mxu0
    %v659 = vmul.f32 %v638, %v631
    %660 = vadd.xlane.f32.xlu0 %v659
    %v661 = vpop.xlane.xlu0 %660
    %v662 = vrot.slane %v661, 4
    %v663 = vadd.f32 %v661, %v662
    %v664 = vrot.slane %v663, 2
    %v665 = vadd.f32 %v663, %v664
    %v666 = vrot.slane %v665, 1
    %v667 = vadd.f32 %v665, %v666
    %s668 = vtos %v667
    %vm669 = vcmask 64512
    %v670 = vsel %vm669, %v657, -inf
    %671 = vmax.xlane.f32.xlu0 %v670
    %v672 = vpop.xlane.xlu0 %671
    %v673 = vsub.f32 %v657, %v672
    %v674 = vmul.f32 %v673, 1.442695
    %v675 = vpow.pop %v674
    %v676 = vsel %vm669, %v675, 0.0
    %677 = vadd.xlane.f32.xlu0 %v676
    %v678 = vpop.xlane.xlu0 %677
    %v679 = vlog2.pop %v678
    %v680 = vmul.f32 %v679, 0.6931472
    %v681 = vadd.f32 %v680, %v672
    %v682 = vrot.slane %v670, 4
    %v683 = vmax.f32 %v670, %v682
    %v684 = vrot.slane %v683, 2
    %v685 = vmax.f32 %v683, %v684
    %v686 = vrot.slane %v685, 1
    %v687 = vmax.f32 %v685, %v686
    %v688 = vsub.f32 %v657, %v687
    %v689 = vmul.f32 %v688, 1.442695
    %v690 = vpow.pop %v689
    %v691 = vsel %vm669, %v690, 0.0
    %v692 = vrot.slane %v691, 4
    %v693 = vadd.f32 %v691, %v692
    %v694 = vrot.slane %v693, 2
    %v695 = vadd.f32 %v693, %v694
    %v696 = vrot.slane %v695, 1
    %v697 = vadd.f32 %v695, %v696
    %v698 = vlog2.pop %v697
    %v699 = vmul.f32 %v698, 0.6931472
    %v700 = vadd.f32 %v699, %v687
    %vm701 = vcmask 7168
    %v702 = vsel %vm701, %v681, 0.0
    %703 = vadd.xlane.f32.xlu0 %v702
    %v704 = vpop.xlane.xlu0 %703
    %v705 = vrot.slane %v704, 4
    %v706 = vadd.f32 %v704, %v705
    %v707 = vrot.slane %v706, 2
    %v708 = vadd.f32 %v706, %v707
    %v709 = vrot.slane %v708, 1
    %v710 = vadd.f32 %v708, %v709
    %s711 = vtos %v710
    %vm712 = vcmask 57344
    %v713 = vsel %vm712, %v700, 0.0
    %714 = vadd.xlane.f32.xlu0 %v713
    %v715 = vpop.xlane.xlu0 %714
    %v716 = vrot.slane %v715, 4
    %v717 = vadd.f32 %v715, %v716
    %v718 = vrot.slane %v717, 2
    %v719 = vadd.f32 %v717, %v718
    %v720 = vrot.slane %v719, 1
    %v721 = vadd.f32 %v719, %v720
    %s722 = vtos %v721
    %s723 = sadd.f32 %s711, %s722
    %s724 = smul.f32 %s668, 2.0
    %s725 = ssub.f32 %s723, %s724
    %v726 = vrcp.pop 16.0
    %v727 = vmul.f32 16.0, %v726
    %v728 = vsub.f32 1.0, %v727
    %v729 = vmul.f32 %v726, %v728
    %v730 = vadd.f32 %v726, %v729
    %vm731 = vweird.f32 %v726
    %v732 = vsel %vm731, %v726, %v730
    %s733 = vtos %v732
    %s734 = smul.f32 %s725, %s733
    %s735 = scalar_lea.smem [#allocation7], 0
    %736 = sst [smem:[%s735]] %s734
    // Predicated region
    $region38: #{lit_forward.1} parent=1 // pred_check
      _
    $region39: #{lit_forward.1} parent=1 // pred_check_branch
      %738 = sbr.rel (0) target = $region41
    $region40: #{lit_forward.1} parent=1 // pred_region
      %740 = vsyncadd [#allocation5], 0
      %s742 = sshll.u32 %s8, 4
      %s743 = int_to_ptr.hbm [resolvable:$true] %s742
      %745 = dma.smem_to_hbm [#allocation7], 16, %s743, [#allocation5]
    $region41: #{lit_forward.1} parent=1 // pred_fallthru
      _
    // Predicated region
    $region42: #{lit_forward.1} parent=1 // pred_check
      _
    $region43: #{lit_forward.1} parent=1 // pred_check_branch
      %747 = sbr.rel (0) target = $region45
    $region44: #{lit_forward.1} parent=1 // pred_region
      %749 = dma.done [#allocation5], 16
    $region45: #{lit_forward.1} parent=1 // pred_fallthru
      _
    %750 = sfence
    %751 = vsyncpa [#allocation5], 1
    %752 = vsyncpa [#allocation6], 1

</llo_original>
